<compile_context>
chip_gen: v6e
topology: v6e:2x2x1
jax: 0.10.0
libtpu: 0.0.40
codegen_flags: <defaults>
</compile_context>

<pallas_src>
import functools

import jax
import jax.numpy as jnp
from jax.experimental import pallas as pl
from jax.experimental.pallas import tpu as pltpu

NEG_SLOPE = 0.1
BN_EPS = 1e-5
PAD = 128  # lane/feature padding width; all hidden dims are zero-padded to this

HIDDEN = (128, 64, 32, 16)      # Linear -> BN -> LeakyReLU (-> Dropout)
TAIL = (8, 1)                   # Linear -> LeakyReLU, then Linear -> out


def _leaky_relu(h):
    # max(h, 0.1*h) == LeakyReLU(0.1); 2 VALU ops instead of cmp+mul+select.
    return jnp.maximum(h, NEG_SLOPE * h)


# --------------------------------------------------------------------------
# Kernel (batch on the lane axis, features on sublanes)
# --------------------------------------------------------------------------
def waternet_kernel(x_ref, w1_ref, wmid_ref, w6_ref, b_ref, o_ref, *, epi_dtype):
    bf16 = jnp.bfloat16
    f32 = jnp.float32

    # Biases: (128, 6) f32 in VMEM, cast once to the epilogue dtype.
    b_all = b_ref[...].astype(epi_dtype)

    # Tiny input transpose: cast first (bf16) then transpose (in, tile_b).
    x_t = x_ref[...].astype(bf16).T

    # Block 1: Linear(input_dim, 128) + folded BN + LeakyReLU.  Dropout = id.
    h = jnp.dot(w1_ref[...], x_t, preferred_element_type=epi_dtype)   # (128, tile_b)
    h = _leaky_relu(h + b_all[:, 0:1])

    # Blocks 2-4 (Linear + folded BN + LeakyReLU) and Linear(16,8)+LeakyReLU.
    # Transposed weights are zero-padded to (128,128) so h stays a lane-dense
    # (128, tile_b) tile (padded rows stay exactly 0: leaky(0 + 0) == 0).
    for l in range(4):
        h = jnp.dot(wmid_ref[l], h.astype(bf16), preferred_element_type=epi_dtype)
        h = _leaky_relu(h + b_all[:, l + 1:l + 2])

    # Final Linear(8, 1): (1,128) @ (128, tile_b) -> per-row result on lanes,
    # no transpose needed; final bias added in f32 straight from the f32 ref.
    row = jnp.dot(w6_ref[...], h.astype(bf16), preferred_element_type=f32)
    o_ref[...] = (row + b_ref[0:1, 5:6]).reshape(o_ref.shape).astype(o_ref.dtype)


# --------------------------------------------------------------------------
# Parameters (synthetic, mirroring the PyTorch module shapes) + packing
# --------------------------------------------------------------------------
def init_params(key, input_dim):
    """Raw parameters: weights stored as (in, out) == torch weight.T."""
    dims = (input_dim,) + HIDDEN + TAIL
    params = {}
    for li in range(len(dims) - 1):
        fan_in, fan_out = dims[li], dims[li + 1]
        key, kw, kb = jax.random.split(key, 3)
        bound = fan_in ** -0.5
        params[f"w{li + 1}"] = jax.random.uniform(
            kw, (fan_in, fan_out), jnp.float32, -bound, bound)
        params[f"b{li + 1}"] = jax.random.uniform(
            kb, (fan_out,), jnp.float32, -bound, bound)
    # BatchNorm1d params + running stats for the first 4 blocks (eval mode).
    for li, feat in enumerate(HIDDEN, start=1):
        key, kg, kb2, km, kv = jax.random.split(key, 5)
        params[f"gamma{li}"] = 1.0 + 0.1 * jax.random.normal(kg, (feat,), jnp.float32)
        params[f"beta{li}"] = 0.1 * jax.random.normal(kb2, (feat,), jnp.float32)
        params[f"mean{li}"] = 0.1 * jax.random.normal(km, (feat,), jnp.float32)
        params[f"var{li}"] = jax.random.uniform(kv, (feat,), jnp.float32, 0.5, 1.5)
    return params


def pack_params(params):
    """Fold BN (eval mode) into the Linears, transpose, zero-pad to 128, pack.

    Call ONCE at weight-load time (hoisted out of the per-call forward)."""
    n_layers = len(HIDDEN) + len(TAIL)   # 6
    ws, bs = [], []
    for li in range(1, n_layers + 1):
        w = params[f"w{li}"]             # (in, out)
        b = params[f"b{li}"]
        if li <= len(HIDDEN):            # fold BatchNorm into the Linear
            scale = params[f"gamma{li}"] / jnp.sqrt(params[f"var{li}"] + BN_EPS)
            shift = params[f"beta{li}"] - params[f"mean{li}"] * scale
            w = w * scale[None, :]
            b = b * scale + shift
        ws.append(w)
        bs.append(b)

    def pad_wT(w):                       # (in, out) -> padded (out, in) at top-left
        fi, fo = w.shape
        return jnp.zeros((PAD, PAD), jnp.float32).at[:fo, :fi].set(w.T)

    w1T = ws[0].T.astype(jnp.bfloat16)                                    # (128, in)
    wmidT = jnp.stack([pad_wT(w) for w in ws[1:5]]).astype(jnp.bfloat16)  # (4,128,128)
    w6 = (jnp.zeros((1, PAD), jnp.float32)
          .at[0, :ws[5].shape[0]].set(ws[5][:, 0])
          .astype(jnp.bfloat16))                                          # (1, 128)
    biasT = jnp.zeros((PAD, 6), jnp.float32)                              # (128, 6)
    for l, b in enumerate(bs):
        biasT = biasT.at[:b.shape[0], l].set(b)
    return w1T, wmidT, w6, biasT


# --------------------------------------------------------------------------
# Tile / per-generation config
# --------------------------------------------------------------------------
def _device_kind():
    try:
        return jax.devices()[0].device_kind.lower()
    except Exception:
        return ""


def _default_tile_b(B, multi_core):
    if multi_core:
        # 2 TensorCores share the 'parallel' batch axis: pick the largest tile
        # (<= 4096, multiple of 8) that gives an even grid of >= 2 steps.
        start = min(B // 2, 4096)
        start -= start % 8
        for t in range(start, 7, -8):
            if B % t == 0 and (B // t) % 2 == 0:
                return t
    # Single TensorCore (v5e / v6e): the grid is a serial loop -> one maximal
    # tile.  (For very wide inputs, reduce tile_b or raise vmem_limit_bytes.)
    if B <= 4096:
        return B
    for t in (4096, 2048, 1024, 512, 256, 128):
        if B % t == 0:
            return t
    return B


def kernel_config(B, tile_b=None):
    kind = _device_kind()
    multi_core = any(s in kind for s in ("v7", "7x", "v4", "v5p"))
    use_bf16_epi = ("v6" in kind) or ("v7" in kind) or ("7x" in kind)
    if tile_b is None:
        tile_b = _default_tile_b(B, multi_core)
    return tile_b, use_bf16_epi


# --------------------------------------------------------------------------
# Forward wrapper
# --------------------------------------------------------------------------
@functools.partial(jax.jit, static_argnames=("tile_b", "use_bf16_epi"))
def _forward_impl(x, w1T, wmidT, w6, biasT, *, tile_b, use_bf16_epi):
    B, input_dim = x.shape
    num_tiles = B // tile_b
    epi_dtype = jnp.bfloat16 if use_bf16_epi else jnp.float32
    kernel = functools.partial(waternet_kernel, epi_dtype=epi_dtype)

    in_specs = [
        pl.BlockSpec((tile_b, input_dim), lambda i: (i, 0)),   # x, f32 (cast in-kernel)
        pl.BlockSpec(w1T.shape, lambda i: (0, 0)),
        pl.BlockSpec(wmidT.shape, lambda i: (0, 0, 0)),
        pl.BlockSpec(w6.shape, lambda i: (0, 0)),
        pl.BlockSpec(biasT.shape, lambda i: (0, 0)),
    ]
    out_spec = pl.BlockSpec((1, 1, tile_b), lambda i: (i, 0, 0))

    out = pl.pallas_call(
        kernel,
        out_shape=jax.ShapeDtypeStruct((num_tiles, 1, tile_b), jnp.float32),
        grid_spec=pltpu.PrefetchScalarGridSpec(
            num_scalar_prefetch=0,
            grid=(num_tiles,),
            in_specs=in_specs,
            out_specs=out_spec,
        ),
        compiler_params=pltpu.CompilerParams(
            dimension_semantics=("parallel",)),
    )(x, w1T, wmidT, w6, biasT)
    # Reshape only to match the torch module's (B, 1) output; consumers that can
    # take the lane-major (num_tiles, 1, tile_b) layout may skip this relayout.
    return out.reshape(B, 1)


def waternet_forward(x, packed, tile_b=None, use_bf16_epi=None):
    B = x.shape[0]
    auto_tile, auto_epi = kernel_config(B, tile_b)
    tile_b = auto_tile if tile_b is None else tile_b
    use_bf16_epi = auto_epi if use_bf16_epi is None else use_bf16_epi
    assert B % tile_b == 0, "batch must be divisible by tile_b"
    return _forward_impl(x, *packed, tile_b=tile_b, use_bf16_epi=use_bf16_epi)


# --------------------------------------------------------------------------
# References
# --------------------------------------------------------------------------
def waternet_reference(x, params):
    """Pure-f32 reference with the exact PyTorch eval-mode semantics."""
    h = x
    for li in range(1, 5):
        h = h @ params[f"w{li}"] + params[f"b{li}"]
        scale = params[f"gamma{li}"] / jnp.sqrt(params[f"var{li}"] + BN_EPS)
        h = (h - params[f"mean{li}"]) * scale + params[f"beta{li}"]
        h = _leaky_relu(h)                       # Dropout = identity (eval)
    h = _leaky_relu(h @ params["w5"] + params["b5"])
    return h @ params["w6"] + params["b6"]


def waternet_reference_packed(x, w1T, wmidT, w6, biasT, *, use_bf16_epi):
    """Mirrors the kernel's exact (transposed, bf16-operand) math."""
    bf16 = jnp.bfloat16
    epi = jnp.bfloat16 if use_bf16_epi else jnp.float32
    b_all = biasT.astype(epi)
    h = jnp.dot(w1T, x.astype(bf16).T, preferred_element_type=epi)
    h = _leaky_relu(h + b_all[:, 0:1])
    for l in range(4):
        h = jnp.dot(wmidT[l], h.astype(bf16), preferred_element_type=epi)
        h = _leaky_relu(h + b_all[:, l + 1:l + 2])
    row = jnp.dot(w6, h.astype(bf16), preferred_element_type=jnp.float32)
    return (row + biasT[0:1, 5:6]).T             # (B, 1)


# --------------------------------------------------------------------------
if __name__ == "__main__":
    INPUT_DIM = 16
    BATCH = 256

    key = jax.random.PRNGKey(0)
    kx, kp = jax.random.split(key)
    x = jax.random.normal(kx, (BATCH, INPUT_DIM), jnp.float32)
    params = init_params(kp, INPUT_DIM)

    # BN fold + padding + bf16 packing happens ONCE here (not per forward call).
    packed = pack_params(params)
    packed = jax.tree_util.tree_map(jax.block_until_ready, packed)

    tile_b, use_bf16_epi = kernel_config(BATCH)
    out = waternet_forward(x, packed, tile_b=tile_b, use_bf16_epi=use_bf16_epi)
    out = jax.block_until_ready(out)
    assert out.shape == (BATCH, 1)

    # Tight-ish check against a reference doing the kernel's exact math.
    ref_mirror = waternet_reference_packed(x, *packed, use_bf16_epi=use_bf16_epi)
    assert jnp.allclose(out, ref_mirror, atol=2e-2, rtol=2e-2), \
        "mismatch vs mirrored (packed) reference"

    # Loose check against pure-f32 eval-mode semantics (bf16 operands/epilogues
    # introduce small rounding differences).
    ref_f32 = waternet_reference(x, params)
    assert jnp.allclose(out, ref_f32, atol=6e-2, rtol=6e-2), \
        "mismatch vs f32 reference"

    print("KERNEL_OK")
</pallas_src>

<mosaic_0001>
module attributes {stable_mosaic.version = 11 : i64} {
  func.func @waternet_kernel(%arg0: i32, %arg1: memref<256x16xf32, #tpu.memory_space<vmem>>, %arg2: memref<128x16xbf16, #tpu.memory_space<vmem>>, %arg3: memref<4x128x128xbf16, #tpu.memory_space<vmem>>, %arg4: memref<1x128xbf16, #tpu.memory_space<vmem>>, %arg5: memref<128x6xf32, #tpu.memory_space<vmem>>, %arg6: memref<1x1x256xf32, #tpu.memory_space<vmem>>) attributes {dimension_semantics = [#tpu.dimension_semantics<parallel>], iteration_bounds = array<i64: 1>, scalar_prefetch = 0 : i64, scratch_operands = 0 : i64, tpu.core_type = #tpu.core_type<tc>, window_params = [{transform_indices = @transform_0, window_bounds = array<i64: 256, 16>}, {pipeline_mode = #tpu.pipeline_mode<synchronous>, transform_indices = @transform_1, window_bounds = array<i64: 128, 16>}, {pipeline_mode = #tpu.pipeline_mode<synchronous>, transform_indices = @transform_2, window_bounds = array<i64: 4, 128, 128>}, {pipeline_mode = #tpu.pipeline_mode<synchronous>, transform_indices = @transform_3, window_bounds = array<i64: 1, 128>}, {pipeline_mode = #tpu.pipeline_mode<synchronous>, transform_indices = @transform_4, window_bounds = array<i64: 128, 6>}, {transform_indices = @transform_5, window_bounds = array<i64: 1, 1, 256>}]} {
    %c0 = arith.constant 0 : index
    %c0_0 = arith.constant 0 : index
    %0 = vector.load %arg5[%c0, %c0_0] : memref<128x6xf32, #tpu.memory_space<vmem>>, vector<128x6xf32>
    %c0_1 = arith.constant 0 : index
    %c0_2 = arith.constant 0 : index
    %1 = vector.load %arg1[%c0_1, %c0_2] : memref<256x16xf32, #tpu.memory_space<vmem>>, vector<256x16xf32>
    %2 = arith.truncf %1 : vector<256x16xf32> to vector<256x16xbf16>
    %3 = tpu.transpose %2, [1, 0] : vector<256x16xbf16> -> vector<16x256xbf16>
    %c0_3 = arith.constant 0 : index
    %c0_4 = arith.constant 0 : index
    %4 = vector.load %arg2[%c0_3, %c0_4] : memref<128x16xbf16, #tpu.memory_space<vmem>>, vector<128x16xbf16>
    %cst = arith.constant dense<0.000000e+00> : vector<128x256xf32>
    %5 = tpu.matmul %4, %3, %cst {dimension_numbers = #tpu.dot_dimension_numbers<[1], [0], [0], [1], [0, 0, 1, 1], [], []>} : vector<128x16xbf16>, vector<16x256xbf16>, vector<128x256xf32> -> vector<128x256xf32>
    %6 = vector.extract_strided_slice %0 {offsets = [0, 0], sizes = [128, 1], strides = [1, 1]} : vector<128x6xf32> to vector<128x1xf32>
    %7 = vector.broadcast %6 : vector<128x1xf32> to vector<128x256xf32>
    %8 = arith.addf %5, %7 : vector<128x256xf32>
    %cst_5 = arith.constant 1.000000e-01 : f32
    %9 = vector.broadcast %cst_5 : f32 to vector<128x256xf32>
    %10 = arith.mulf %9, %8 : vector<128x256xf32>
    %11 = arith.maximumf %8, %10 : vector<128x256xf32>
    %c0_6 = arith.constant 0 : index
    %c0_7 = arith.constant 0 : index
    %c0_8 = arith.constant 0 : index
    %12 = vector.load %arg3[%c0_6, %c0_7, %c0_8] : memref<4x128x128xbf16, #tpu.memory_space<vmem>>, vector<1x128x128xbf16>
    %13 = vector.shape_cast %12 : vector<1x128x128xbf16> to vector<128x128xbf16>
    %14 = arith.truncf %11 : vector<128x256xf32> to vector<128x256xbf16>
    %cst_9 = arith.constant dense<0.000000e+00> : vector<128x256xf32>
    %15 = tpu.matmul %13, %14, %cst_9 {dimension_numbers = #tpu.dot_dimension_numbers<[1], [0], [0], [1], [0, 0, 1, 1], [], []>} : vector<128x128xbf16>, vector<128x256xbf16>, vector<128x256xf32> -> vector<128x256xf32>
    %16 = vector.extract_strided_slice %0 {offsets = [0, 1], sizes = [128, 1], strides = [1, 1]} : vector<128x6xf32> to vector<128x1xf32>
    %17 = vector.broadcast %16 : vector<128x1xf32> to vector<128x256xf32>
    %18 = arith.addf %15, %17 : vector<128x256xf32>
    %cst_10 = arith.constant 1.000000e-01 : f32
    %19 = vector.broadcast %cst_10 : f32 to vector<128x256xf32>
    %20 = arith.mulf %19, %18 : vector<128x256xf32>
    %21 = arith.maximumf %18, %20 : vector<128x256xf32>
    %c1 = arith.constant 1 : index
    %c0_11 = arith.constant 0 : index
    %c0_12 = arith.constant 0 : index
    %22 = vector.load %arg3[%c1, %c0_11, %c0_12] : memref<4x128x128xbf16, #tpu.memory_space<vmem>>, vector<1x128x128xbf16>
    %23 = vector.shape_cast %22 : vector<1x128x128xbf16> to vector<128x128xbf16>
    %24 = arith.truncf %21 : vector<128x256xf32> to vector<128x256xbf16>
    %cst_13 = arith.constant dense<0.000000e+00> : vector<128x256xf32>
    %25 = tpu.matmul %23, %24, %cst_13 {dimension_numbers = #tpu.dot_dimension_numbers<[1], [0], [0], [1], [0, 0, 1, 1], [], []>} : vector<128x128xbf16>, vector<128x256xbf16>, vector<128x256xf32> -> vector<128x256xf32>
    %26 = vector.extract_strided_slice %0 {offsets = [0, 2], sizes = [128, 1], strides = [1, 1]} : vector<128x6xf32> to vector<128x1xf32>
    %27 = vector.broadcast %26 : vector<128x1xf32> to vector<128x256xf32>
    %28 = arith.addf %25, %27 : vector<128x256xf32>
    %cst_14 = arith.constant 1.000000e-01 : f32
    %29 = vector.broadcast %cst_14 : f32 to vector<128x256xf32>
    %30 = arith.mulf %29, %28 : vector<128x256xf32>
    %31 = arith.maximumf %28, %30 : vector<128x256xf32>
    %c2 = arith.constant 2 : index
    %c0_15 = arith.constant 0 : index
    %c0_16 = arith.constant 0 : index
    %32 = vector.load %arg3[%c2, %c0_15, %c0_16] : memref<4x128x128xbf16, #tpu.memory_space<vmem>>, vector<1x128x128xbf16>
    %33 = vector.shape_cast %32 : vector<1x128x128xbf16> to vector<128x128xbf16>
    %34 = arith.truncf %31 : vector<128x256xf32> to vector<128x256xbf16>
    %cst_17 = arith.constant dense<0.000000e+00> : vector<128x256xf32>
    %35 = tpu.matmul %33, %34, %cst_17 {dimension_numbers = #tpu.dot_dimension_numbers<[1], [0], [0], [1], [0, 0, 1, 1], [], []>} : vector<128x128xbf16>, vector<128x256xbf16>, vector<128x256xf32> -> vector<128x256xf32>
    %36 = vector.extract_strided_slice %0 {offsets = [0, 3], sizes = [128, 1], strides = [1, 1]} : vector<128x6xf32> to vector<128x1xf32>
    %37 = vector.broadcast %36 : vector<128x1xf32> to vector<128x256xf32>
    %38 = arith.addf %35, %37 : vector<128x256xf32>
    %cst_18 = arith.constant 1.000000e-01 : f32
    %39 = vector.broadcast %cst_18 : f32 to vector<128x256xf32>
    %40 = arith.mulf %39, %38 : vector<128x256xf32>
    %41 = arith.maximumf %38, %40 : vector<128x256xf32>
    %c3 = arith.constant 3 : index
    %c0_19 = arith.constant 0 : index
    %c0_20 = arith.constant 0 : index
    %42 = vector.load %arg3[%c3, %c0_19, %c0_20] : memref<4x128x128xbf16, #tpu.memory_space<vmem>>, vector<1x128x128xbf16>
    %43 = vector.shape_cast %42 : vector<1x128x128xbf16> to vector<128x128xbf16>
    %44 = arith.truncf %41 : vector<128x256xf32> to vector<128x256xbf16>
    %cst_21 = arith.constant dense<0.000000e+00> : vector<128x256xf32>
    %45 = tpu.matmul %43, %44, %cst_21 {dimension_numbers = #tpu.dot_dimension_numbers<[1], [0], [0], [1], [0, 0, 1, 1], [], []>} : vector<128x128xbf16>, vector<128x256xbf16>, vector<128x256xf32> -> vector<128x256xf32>
    %46 = vector.extract_strided_slice %0 {offsets = [0, 4], sizes = [128, 1], strides = [1, 1]} : vector<128x6xf32> to vector<128x1xf32>
    %47 = vector.broadcast %46 : vector<128x1xf32> to vector<128x256xf32>
    %48 = arith.addf %45, %47 : vector<128x256xf32>
    %cst_22 = arith.constant 1.000000e-01 : f32
    %49 = vector.broadcast %cst_22 : f32 to vector<128x256xf32>
    %50 = arith.mulf %49, %48 : vector<128x256xf32>
    %51 = arith.maximumf %48, %50 : vector<128x256xf32>
    %c0_23 = arith.constant 0 : index
    %c0_24 = arith.constant 0 : index
    %52 = vector.load %arg4[%c0_23, %c0_24] : memref<1x128xbf16, #tpu.memory_space<vmem>>, vector<1x128xbf16>
    %53 = arith.truncf %51 : vector<128x256xf32> to vector<128x256xbf16>
    %cst_25 = arith.constant dense<0.000000e+00> : vector<1x256xf32>
    %54 = tpu.matmul %52, %53, %cst_25 {dimension_numbers = #tpu.dot_dimension_numbers<[1], [0], [0], [1], [0, 0, 1, 1], [], []>} : vector<1x128xbf16>, vector<128x256xbf16>, vector<1x256xf32> -> vector<1x256xf32>
    %c0_26 = arith.constant 0 : index
    %c5 = arith.constant 5 : index
    %55 = vector.load %arg5[%c0_26, %c5] : memref<128x6xf32, #tpu.memory_space<vmem>>, vector<1x1xf32>
    %56 = vector.broadcast %55 : vector<1x1xf32> to vector<1x256xf32>
    %57 = arith.addf %54, %56 : vector<1x256xf32>
    %58 = vector.shape_cast %57 : vector<1x256xf32> to vector<1x1x256xf32>
    %c0_27 = arith.constant 0 : index
    %c0_28 = arith.constant 0 : index
    %c0_29 = arith.constant 0 : index
    %59 = vector.load %arg6[%c0_27, %c0_28, %c0_29] : memref<1x1x256xf32, #tpu.memory_space<vmem>>, vector<1x1x256xf32>
    tpu.vector_store %arg6[%c0_27, %c0_28, %c0_29], %58 {strides = array<i32>} : memref<1x1x256xf32, #tpu.memory_space<vmem>>, vector<1x1x256xf32>,
    return
  }
  func.func @transform_0(%arg0: i32) -> (i32, i32) {
    %c0_i32 = arith.constant 0 : i32
    %c0_i32_0 = arith.constant 0 : i32
    return %arg0, %c0_i32 : i32, i32
  }
  func.func @transform_1(%arg0: i32) -> (i32, i32) {
    %c0_i32 = arith.constant 0 : i32
    %c0_i32_0 = arith.constant 0 : i32
    %c0_i32_1 = arith.constant 0 : i32
    return %c0_i32, %c0_i32_0 : i32, i32
  }
  func.func @transform_2(%arg0: i32) -> (i32, i32, i32) {
    %c0_i32 = arith.constant 0 : i32
    %c0_i32_0 = arith.constant 0 : i32
    %c0_i32_1 = arith.constant 0 : i32
    %c0_i32_2 = arith.constant 0 : i32
    return %c0_i32, %c0_i32_0, %c0_i32_1 : i32, i32, i32
  }
  func.func @transform_3(%arg0: i32) -> (i32, i32) {
    %c0_i32 = arith.constant 0 : i32
    %c0_i32_0 = arith.constant 0 : i32
    %c0_i32_1 = arith.constant 0 : i32
    return %c0_i32, %c0_i32_0 : i32, i32
  }
  func.func @transform_4(%arg0: i32) -> (i32, i32) {
    %c0_i32 = arith.constant 0 : i32
    %c0_i32_0 = arith.constant 0 : i32
    %c0_i32_1 = arith.constant 0 : i32
    return %c0_i32, %c0_i32_0 : i32, i32
  }
  func.func @transform_5(%arg0: i32) -> (i32, i32, i32) {
    %c0_i32 = arith.constant 0 : i32
    %c0_i32_0 = arith.constant 0 : i32
    %c0_i32_1 = arith.constant 0 : i32
    return %arg0, %c0_i32, %c0_i32_0 : i32, i32, i32
  }
}

</mosaic_0001>

<llo_original>
// kernel: _forward_impl.1
$region0: #{_forward_impl.1}
  #allocation0 [shape = 'u32[]', space=smem, size = 0x4, offset = 0x4, fixed_abs, tag = 'smem constant byte address 0x4 - core index']
  #allocation1 [shape = 'u32[144,128]{1,0:T(1,128)}', space=vmem, size = 0x12000, scoped, tag = 'internal scratch']
  %s0 = inlined_call_operand.vmem [shape: f32[256,16], index: 0, kind: input, shape index: {}]
  %s1 = inlined_call_operand.vmem [shape: bf16[128,16], index: 1, kind: input, shape index: {}]
  %s2 = inlined_call_operand.vmem [shape: bf16[4,128,128], index: 2, kind: input, shape index: {}]
  %s3 = inlined_call_operand.vmem [shape: bf16[1,128], index: 3, kind: input, shape index: {}]
  %s4 = inlined_call_operand.vmem [shape: f32[128,6], index: 4, kind: input, shape index: {}]
  %s5 = inlined_call_operand.hbm [shape: f32[1,1,256], index: 5, kind: output, shape index: {}]
  %s6 = sld [smem:[#allocation0]]
  $region30: #{_forward_impl.1} parent=0
    _
  %s8 = ssub.s32 1, %s6
  %s9 = scalar_select 0, %s8, %s6
  $region1: #{_forward_impl.1} parent=0
    #allocation2 [shape = 'u8[1024]{0}', space=vmem, size = 0x400, scoped, tag = 'output window, operand 0, single buffered']
    #allocation3 [shape = 's32[1]{0}', space=sflag, size = 0x4, scoped, tag = 'scoped memory for _forward_impl.1']
    %10 = vsyncpa [#allocation3], 0
    // Predicated region
    $region2: #{_forward_impl.1} parent=1 // pred_check
      _
    $region3: #{_forward_impl.1} parent=1 // pred_check_branch
      %12 = sbr.rel (0) target = $region5
    $region4: #{_forward_impl.1} parent=1 // pred_region
      _
    $region5: #{_forward_impl.1} parent=1 // pred_fallthru
      _
    // Predicated region
    $region6: #{_forward_impl.1} parent=1 // pred_check
      _
    $region7: #{_forward_impl.1} parent=1 // pred_check_branch
      %14 = sbr.rel (0) target = $region9
    $region8: #{_forward_impl.1} parent=1 // pred_region
      _
    $region9: #{_forward_impl.1} parent=1 // pred_fallthru
      _
    // Predicated region
    $region10: #{_forward_impl.1} parent=1 // pred_check
      _
    $region11: #{_forward_impl.1} parent=1 // pred_check_branch
      %16 = sbr.rel (0) target = $region13
    $region12: #{_forward_impl.1} parent=1 // pred_region
      _
    $region13: #{_forward_impl.1} parent=1 // pred_fallthru
      _
    // Predicated region
    $region14: #{_forward_impl.1} parent=1 // pred_check
      _
    $region15: #{_forward_impl.1} parent=1 // pred_check_branch
      %18 = sbr.rel (0) target = $region17
    $region16: #{_forward_impl.1} parent=1 // pred_region
      _
    $region17: #{_forward_impl.1} parent=1 // pred_fallthru
      _
    // Predicated region
    $region18: #{_forward_impl.1} parent=1 // pred_check
      _
    $region19: #{_forward_impl.1} parent=1 // pred_check_branch
      %20 = sbr.rel (0) target = $region21
    $region20: #{_forward_impl.1} parent=1 // pred_region
      _
    $region21: #{_forward_impl.1} parent=1 // pred_fallthru
      _
    %v22 = vld [vmem:[%s4] sm:$0xff]
    %v23 = vld [vmem:[%s4 + $0x8] sm:$0xff]
    %v24 = vld [vmem:[%s4 + $0x10] sm:$0xff]
    %v25 = vld [vmem:[%s4 + $0x18] sm:$0xff]
    %v26 = vld [vmem:[%s4 + $0x20] sm:$0xff]
    %v27 = vld [vmem:[%s4 + $0x28] sm:$0xff]
    %v28 = vld [vmem:[%s4 + $0x30] sm:$0xff]
    %v29 = vld [vmem:[%s4 + $0x38] sm:$0xff]
    %v30 = vld [vmem:[%s4 + $0x40] sm:$0xff]
    %v31 = vld [vmem:[%s4 + $0x48] sm:$0xff]
    %v32 = vld [vmem:[%s4 + $0x50] sm:$0xff]
    %v33 = vld [vmem:[%s4 + $0x58] sm:$0xff]
    %v34 = vld [vmem:[%s4 + $0x60] sm:$0xff]
    %v35 = vld [vmem:[%s4 + $0x68] sm:$0xff]
    %v36 = vld [vmem:[%s4 + $0x70] sm:$0xff]
    %v37 = vld [vmem:[%s4 + $0x78] sm:$0xff]
    %v38 = vld [vmem:[%s0] sm:$0xff]
    %v39 = vld [vmem:[%s0 + $0x8] sm:$0xff]
    %v40 = vld [vmem:[%s0 + $0x10] sm:$0xff]
    %v41 = vld [vmem:[%s0 + $0x18] sm:$0xff]
    %v42 = vld [vmem:[%s0 + $0x20] sm:$0xff]
    %v43 = vld [vmem:[%s0 + $0x28] sm:$0xff]
    %v44 = vld [vmem:[%s0 + $0x30] sm:$0xff]
    %v45 = vld [vmem:[%s0 + $0x38] sm:$0xff]
    %v46 = vld [vmem:[%s0 + $0x40] sm:$0xff]
    %v47 = vld [vmem:[%s0 + $0x48] sm:$0xff]
    %v48 = vld [vmem:[%s0 + $0x50] sm:$0xff]
    %v49 = vld [vmem:[%s0 + $0x58] sm:$0xff]
    %v50 = vld [vmem:[%s0 + $0x60] sm:$0xff]
    %v51 = vld [vmem:[%s0 + $0x68] sm:$0xff]
    %v52 = vld [vmem:[%s0 + $0x70] sm:$0xff]
    %v53 = vld [vmem:[%s0 + $0x78] sm:$0xff]
    %v54 = vld [vmem:[%s0 + $0x80] sm:$0xff]
    %v55 = vld [vmem:[%s0 + $0x88] sm:$0xff]
    %v56 = vld [vmem:[%s0 + $0x90] sm:$0xff]
    %v57 = vld [vmem:[%s0 + $0x98] sm:$0xff]
    %v58 = vld [vmem:[%s0 + $0xa0] sm:$0xff]
    %v59 = vld [vmem:[%s0 + $0xa8] sm:$0xff]
    %v60 = vld [vmem:[%s0 + $0xb0] sm:$0xff]
    %v61 = vld [vmem:[%s0 + $0xb8] sm:$0xff]
    %v62 = vld [vmem:[%s0 + $0xc0] sm:$0xff]
    %v63 = vld [vmem:[%s0 + $0xc8] sm:$0xff]
    %v64 = vld [vmem:[%s0 + $0xd0] sm:$0xff]
    %v65 = vld [vmem:[%s0 + $0xd8] sm:$0xff]
    %v66 = vld [vmem:[%s0 + $0xe0] sm:$0xff]
    %v67 = vld [vmem:[%s0 + $0xe8] sm:$0xff]
    %v68 = vld [vmem:[%s0 + $0xf0] sm:$0xff]
    %v69 = vld [vmem:[%s0 + $0xf8] sm:$0xff]
    %v70 = vpack.c.bf16 %v39, %v38
    %v71 = vpack.c.bf16 %v41, %v40
    %v72 = vpack.c.bf16 %v43, %v42
    %v73 = vpack.c.bf16 %v45, %v44
    %v74 = vpack.c.bf16 %v47, %v46
    %v75 = vpack.c.bf16 %v49, %v48
    %v76 = vpack.c.bf16 %v51, %v50
    %v77 = vpack.c.bf16 %v53, %v52
    %v78 = vpack.c.bf16 %v55, %v54
    %v79 = vpack.c.bf16 %v57, %v56
    %v80 = vpack.c.bf16 %v59, %v58
    %v81 = vpack.c.bf16 %v61, %v60
    %v82 = vpack.c.bf16 %v63, %v62
    %v83 = vpack.c.bf16 %v65, %v64
    %v84 = vpack.c.bf16 %v67, %v66
    %v85 = vpack.c.bf16 %v69, %v68
    %v86 = vld [vmem:[%s1] sm:$0xf]
    %v87 = vld [vmem:[%s1 + $0x4] sm:$0xf]
    %v88 = vld [vmem:[%s1 + $0x8] sm:$0xf]
    %v89 = vld [vmem:[%s1 + $0xc] sm:$0xf]
    %v90 = vld [vmem:[%s1 + $0x10] sm:$0xf]
    %v91 = vld [vmem:[%s1 + $0x14] sm:$0xf]
    %v92 = vld [vmem:[%s1 + $0x18] sm:$0xf]
    %v93 = vld [vmem:[%s1 + $0x1c] sm:$0xf]
    %v94 = vld [vmem:[%s1 + $0x20] sm:$0xf]
    %v95 = vld [vmem:[%s1 + $0x24] sm:$0xf]
    %v96 = vld [vmem:[%s1 + $0x28] sm:$0xf]
    %v97 = vld [vmem:[%s1 + $0x2c] sm:$0xf]
    %v98 = vld [vmem:[%s1 + $0x30] sm:$0xf]
    %v99 = vld [vmem:[%s1 + $0x34] sm:$0xf]
    %v100 = vld [vmem:[%s1 + $0x38] sm:$0xf]
    %v101 = vld [vmem:[%s1 + $0x3c] sm:$0xf]
    %103 = vset.pattern.permute.xlu0 0
    %104 = vperm.xlu0 %103, %v22
    %v105 = vpop.permute.xlu0 %104
    %108 = vset.pattern.permute.xlu0 0
    %109 = vperm.xlu0 %108, %v23
    %v110 = vpop.permute.xlu0 %109
    %113 = vset.pattern.permute.xlu0 0
    %114 = vperm.xlu0 %113, %v24
    %v115 = vpop.permute.xlu0 %114
    %118 = vset.pattern.permute.xlu0 0
    %119 = vperm.xlu0 %118, %v25
    %v120 = vpop.permute.xlu0 %119
    %123 = vset.pattern.permute.xlu0 0
    %124 = vperm.xlu0 %123, %v26
    %v125 = vpop.permute.xlu0 %124
    %128 = vset.pattern.permute.xlu0 0
    %129 = vperm.xlu0 %128, %v27
    %v130 = vpop.permute.xlu0 %129
    %133 = vset.pattern.permute.xlu0 0
    %134 = vperm.xlu0 %133, %v28
    %v135 = vpop.permute.xlu0 %134
    %138 = vset.pattern.permute.xlu0 0
    %139 = vperm.xlu0 %138, %v29
    %v140 = vpop.permute.xlu0 %139
    %143 = vset.pattern.permute.xlu0 0
    %144 = vperm.xlu0 %143, %v30
    %v145 = vpop.permute.xlu0 %144
    %148 = vset.pattern.permute.xlu0 0
    %149 = vperm.xlu0 %148, %v31
    %v150 = vpop.permute.xlu0 %149
    %153 = vset.pattern.permute.xlu0 0
    %154 = vperm.xlu0 %153, %v32
    %v155 = vpop.permute.xlu0 %154
    %158 = vset.pattern.permute.xlu0 0
    %159 = vperm.xlu0 %158, %v33
    %v160 = vpop.permute.xlu0 %159
    %163 = vset.pattern.permute.xlu0 0
    %164 = vperm.xlu0 %163, %v34
    %v165 = vpop.permute.xlu0 %164
    %168 = vset.pattern.permute.xlu0 0
    %169 = vperm.xlu0 %168, %v35
    %v170 = vpop.permute.xlu0 %169
    %173 = vset.pattern.permute.xlu0 0
    %174 = vperm.xlu0 %173, %v36
    %v175 = vpop.permute.xlu0 %174
    %178 = vset.pattern.permute.xlu0 0
    %179 = vperm.xlu0 %178, %v37
    %v180 = vpop.permute.xlu0 %179
    %v198 = vunpack.c.l.b16 %v86
    %v199 = vunpack.c.l.b16 %v87
    %v200 = vunpack.c.l.b16 %v88
    %v201 = vunpack.c.l.b16 %v89
    %v202 = vunpack.c.l.b16 %v90
    %v203 = vunpack.c.l.b16 %v91
    %v204 = vunpack.c.l.b16 %v92
    %v205 = vunpack.c.l.b16 %v93
    %v206 = vunpack.c.l.b16 %v94
    %v207 = vunpack.c.l.b16 %v95
    %v208 = vunpack.c.l.b16 %v96
    %v209 = vunpack.c.l.b16 %v97
    %v210 = vunpack.c.l.b16 %v98
    %v211 = vunpack.c.l.b16 %v99
    %v212 = vunpack.c.l.b16 %v100
    %v213 = vunpack.c.l.b16 %v101
    %v214 = vpack.c.b16 %v199, %v198
    %v215 = vpack.c.b16 %v201, %v200
    %v216 = vpack.c.b16 %v203, %v202
    %v217 = vpack.c.b16 %v205, %v204
    %v218 = vpack.c.b16 %v207, %v206
    %v219 = vpack.c.b16 %v209, %v208
    %v220 = vpack.c.b16 %v211, %v210
    %v221 = vpack.c.b16 %v213, %v212
    %vm222 = vcmask 130048
    %v224 = vsel %vm222, %v214, 0
    %v227 = vsel %vm222, %v215, 0
    %v230 = vsel %vm222, %v216, 0
    %v233 = vsel %vm222, %v217, 0
    %v236 = vsel %vm222, %v218, 0
    %v239 = vsel %vm222, %v219, 0
    %v242 = vsel %vm222, %v220, 0
    %v245 = vsel %vm222, %v221, 0
    %v248 = vsel %vm222, %v70, 0
    %v251 = vsel %vm222, %v71, 0
    %v254 = vsel %vm222, %v72, 0
    %v257 = vsel %vm222, %v73, 0
    %v260 = vsel %vm222, %v74, 0
    %v263 = vsel %vm222, %v75, 0
    %v266 = vsel %vm222, %v76, 0
    %v269 = vsel %vm222, %v77, 0
    %v272 = vsel %vm222, %v78, 0
    %v275 = vsel %vm222, %v79, 0
    %v278 = vsel %vm222, %v80, 0
    %v281 = vsel %vm222, %v81, 0
    %v284 = vsel %vm222, %v82, 0
    %v287 = vsel %vm222, %v83, 0
    %v290 = vsel %vm222, %v84, 0
    %v293 = vsel %vm222, %v85, 0
    %295 = vmatprep.subr.bf16.mxu0 0
    %296 = vmatpush1.bf16.xpose.msra.mxu0 %v269
    %297 = vmatprep.subr.bf16.mxu0 0
    %298 = vmatpush1.bf16.xpose.msra.mxu0 %v266
    %299 = vmatprep.subr.bf16.mxu0 0
    %300 = vmatpush1.bf16.xpose.msra.mxu0 %v263
    %301 = vmatprep.subr.bf16.mxu0 0
    %302 = vmatpush1.bf16.xpose.msra.mxu0 %v260
    %303 = vmatprep.subr.bf16.mxu0 0
    %304 = vmatpush1.bf16.xpose.msra.mxu0 %v257
    %305 = vmatprep.subr.bf16.mxu0 0
    %306 = vmatpush1.bf16.xpose.msra.mxu0 %v254
    %307 = vmatprep.subr.bf16.mxu0 0
    %308 = vmatpush1.bf16.xpose.msra.mxu0 %v251
    %309 = vmatprep.subr.bf16.mxu0 0
    %310 = vmatpush1.bf16.xpose.msra.mxu0 %v248
    %311 = vmatprep.subr.bf16.mxu0 0
    %312 = vmatpush2.bf16.xpose.msra.mxu0 %v293
    %313 = vmatprep.subr.bf16.mxu0 0
    %314 = vmatpush2.bf16.xpose.msra.mxu0 %v290
    %315 = vmatprep.subr.bf16.mxu0 0
    %316 = vmatpush2.bf16.xpose.msra.mxu0 %v287
    %317 = vmatprep.subr.bf16.mxu0 0
    %318 = vmatpush2.bf16.xpose.msra.mxu0 %v284
    %319 = vmatprep.subr.bf16.mxu0 0
    %320 = vmatpush2.bf16.xpose.msra.mxu0 %v281
    %321 = vmatprep.subr.bf16.mxu0 0
    %322 = vmatpush2.bf16.xpose.msra.mxu0 %v278
    %323 = vmatprep.subr.bf16.mxu0 0
    %324 = vmatpush2.bf16.xpose.msra.mxu0 %v275
    %325 = vmatprep.subr.bf16.mxu0 0
    %326 = vmatpush2.bf16.xpose.msra.mxu0 %v272
    %327 = vmatprep.mubr.bf16.mxu0 0
    %328 = vmatmul.mubr.bf16.gmra.mxu0 %v224
    %v329 = vpop.f32.mrf.mxu0
    %v330 = vadd.f32 %v105, %v329
    %v331 = vpop.f32.mrf.mxu0
    %v332 = vadd.f32 %v105, %v331
    %v333 = vpop.f32.mrf.mxu0
    %v334 = vadd.f32 %v110, %v333
    %v335 = vpop.f32.mrf.mxu0
    %v336 = vadd.f32 %v110, %v335
    %337 = vmatprep.mubr.bf16.mxu0 0
    %338 = vmatmul.mubr.bf16.gmra.mxu0 %v227
    %v339 = vpop.f32.mrf.mxu0
    %v340 = vadd.f32 %v115, %v339
    %v341 = vpop.f32.mrf.mxu0
    %v342 = vadd.f32 %v115, %v341
    %v343 = vpop.f32.mrf.mxu0
    %v344 = vadd.f32 %v120, %v343
    %v345 = vpop.f32.mrf.mxu0
    %v346 = vadd.f32 %v120, %v345
    %347 = vmatprep.mubr.bf16.mxu0 0
    %348 = vmatmul.mubr.bf16.gmra.mxu0 %v230
    %v349 = vpop.f32.mrf.mxu0
    %v350 = vadd.f32 %v125, %v349
    %v351 = vpop.f32.mrf.mxu0
    %v352 = vadd.f32 %v125, %v351
    %v353 = vpop.f32.mrf.mxu0
    %v354 = vadd.f32 %v130, %v353
    %v355 = vpop.f32.mrf.mxu0
    %v356 = vadd.f32 %v130, %v355
    %357 = vmatprep.mubr.bf16.mxu0 0
    %358 = vmatmul.mubr.bf16.gmra.mxu0 %v233
    %v359 = vpop.f32.mrf.mxu0
    %v360 = vadd.f32 %v135, %v359
    %v361 = vpop.f32.mrf.mxu0
    %v362 = vadd.f32 %v135, %v361
    %v363 = vpop.f32.mrf.mxu0
    %v364 = vadd.f32 %v140, %v363
    %v365 = vpop.f32.mrf.mxu0
    %v366 = vadd.f32 %v140, %v365
    %367 = vmatprep.mubr.bf16.mxu0 0
    %368 = vmatmul.mubr.bf16.gmra.mxu0 %v236
    %v369 = vpop.f32.mrf.mxu0
    %v370 = vadd.f32 %v145, %v369
    %v371 = vpop.f32.mrf.mxu0
    %v372 = vadd.f32 %v145, %v371
    %v373 = vpop.f32.mrf.mxu0
    %v374 = vadd.f32 %v150, %v373
    %v375 = vpop.f32.mrf.mxu0
    %v376 = vadd.f32 %v150, %v375
    %377 = vmatprep.mubr.bf16.mxu0 0
    %378 = vmatmul.mubr.bf16.gmra.mxu0 %v239
    %v379 = vpop.f32.mrf.mxu0
    %v380 = vadd.f32 %v155, %v379
    %v381 = vpop.f32.mrf.mxu0
    %v382 = vadd.f32 %v155, %v381
    %v383 = vpop.f32.mrf.mxu0
    %v384 = vadd.f32 %v160, %v383
    %v385 = vpop.f32.mrf.mxu0
    %v386 = vadd.f32 %v160, %v385
    %387 = vmatprep.mubr.bf16.mxu0 0
    %388 = vmatmul.mubr.bf16.gmra.mxu0 %v242
    %v389 = vpop.f32.mrf.mxu0
    %v390 = vadd.f32 %v165, %v389
    %v391 = vpop.f32.mrf.mxu0
    %v392 = vadd.f32 %v165, %v391
    %v393 = vpop.f32.mrf.mxu0
    %v394 = vadd.f32 %v170, %v393
    %v395 = vpop.f32.mrf.mxu0
    %v396 = vadd.f32 %v170, %v395
    %397 = vmatprep.mubr.bf16.mxu0 0
    %398 = vmatmul.mubr.bf16.gmra.mxu0 %v245
    %v399 = vpop.f32.mrf.mxu0
    %v400 = vadd.f32 %v175, %v399
    %v401 = vpop.f32.mrf.mxu0
    %v402 = vadd.f32 %v175, %v401
    %v403 = vpop.f32.mrf.mxu0
    %v404 = vadd.f32 %v180, %v403
    %v405 = vpop.f32.mrf.mxu0
    %v406 = vadd.f32 %v180, %v405
    %407 = vdwg.mxu0
    %v408 = vmul.f32 %v330, 0.1
    %v409 = vmul.f32 %v332, 0.1
    %v410 = vmul.f32 %v334, 0.1
    %v411 = vmul.f32 %v336, 0.1
    %v412 = vmul.f32 %v340, 0.1
    %v413 = vmul.f32 %v342, 0.1
    %v414 = vmul.f32 %v344, 0.1
    %v415 = vmul.f32 %v346, 0.1
    %v416 = vmul.f32 %v350, 0.1
    %v417 = vmul.f32 %v352, 0.1
    %v418 = vmul.f32 %v354, 0.1
    %v419 = vmul.f32 %v356, 0.1
    %v420 = vmul.f32 %v360, 0.1
    %v421 = vmul.f32 %v362, 0.1
    %v422 = vmul.f32 %v364, 0.1
    %v423 = vmul.f32 %v366, 0.1
    %v424 = vmul.f32 %v370, 0.1
    %v425 = vmul.f32 %v372, 0.1
    %v426 = vmul.f32 %v374, 0.1
    %v427 = vmul.f32 %v376, 0.1
    %v428 = vmul.f32 %v380, 0.1
    %v429 = vmul.f32 %v382, 0.1
    %v430 = vmul.f32 %v384, 0.1
    %v431 = vmul.f32 %v386, 0.1
    %v432 = vmul.f32 %v390, 0.1
    %v433 = vmul.f32 %v392, 0.1
    %v434 = vmul.f32 %v394, 0.1
    %v435 = vmul.f32 %v396, 0.1
    %v436 = vmul.f32 %v400, 0.1
    %v437 = vmul.f32 %v402, 0.1
    %v438 = vmul.f32 %v404, 0.1
    %v439 = vmul.f32 %v406, 0.1
    %v440 = vmax.f32 %v330, %v408
    %v441 = vmax.f32 %v332, %v409
    %v442 = vmax.f32 %v334, %v410
    %v443 = vmax.f32 %v336, %v411
    %v444 = vmax.f32 %v340, %v412
    %v445 = vmax.f32 %v342, %v413
    %v446 = vmax.f32 %v344, %v414
    %v447 = vmax.f32 %v346, %v415
    %v448 = vmax.f32 %v350, %v416
    %v449 = vmax.f32 %v352, %v417
    %v450 = vmax.f32 %v354, %v418
    %v451 = vmax.f32 %v356, %v419
    %v452 = vmax.f32 %v360, %v420
    %v453 = vmax.f32 %v362, %v421
    %v454 = vmax.f32 %v364, %v422
    %v455 = vmax.f32 %v366, %v423
    %v456 = vmax.f32 %v370, %v424
    %v457 = vmax.f32 %v372, %v425
    %v458 = vmax.f32 %v374, %v426
    %v459 = vmax.f32 %v376, %v427
    %v460 = vmax.f32 %v380, %v428
    %v461 = vmax.f32 %v382, %v429
    %v462 = vmax.f32 %v384, %v430
    %v463 = vmax.f32 %v386, %v431
    %v464 = vmax.f32 %v390, %v432
    %v465 = vmax.f32 %v392, %v433
    %v466 = vmax.f32 %v394, %v434
    %v467 = vmax.f32 %v396, %v435
    %v468 = vmax.f32 %v400, %v436
    %v469 = vmax.f32 %v402, %v437
    %v470 = vmax.f32 %v404, %v438
    %v471 = vmax.f32 %v406, %v439
    %v472 = vld [vmem:[%s2] sm:$0xf]
    %v473 = vld [vmem:[%s2 + $0x4] sm:$0xf]
    %v474 = vld [vmem:[%s2 + $0x8] sm:$0xf]
    %v475 = vld [vmem:[%s2 + $0xc] sm:$0xf]
    %v476 = vld [vmem:[%s2 + $0x10] sm:$0xf]
    %v477 = vld [vmem:[%s2 + $0x14] sm:$0xf]
    %v478 = vld [vmem:[%s2 + $0x18] sm:$0xf]
    %v479 = vld [vmem:[%s2 + $0x1c] sm:$0xf]
    %v480 = vld [vmem:[%s2 + $0x20] sm:$0xf]
    %v481 = vld [vmem:[%s2 + $0x24] sm:$0xf]
    %v482 = vld [vmem:[%s2 + $0x28] sm:$0xf]
    %v483 = vld [vmem:[%s2 + $0x2c] sm:$0xf]
    %v484 = vld [vmem:[%s2 + $0x30] sm:$0xf]
    %v485 = vld [vmem:[%s2 + $0x34] sm:$0xf]
    %v486 = vld [vmem:[%s2 + $0x38] sm:$0xf]
    %v487 = vld [vmem:[%s2 + $0x3c] sm:$0xf]
    %v488 = vpack.c.bf16 %v442, %v440
    %v489 = vpack.c.bf16 %v443, %v441
    %v490 = vpack.c.bf16 %v446, %v444
    %v491 = vpack.c.bf16 %v447, %v445
    %v492 = vpack.c.bf16 %v450, %v448
    %v493 = vpack.c.bf16 %v451, %v449
    %v494 = vpack.c.bf16 %v454, %v452
    %v495 = vpack.c.bf16 %v455, %v453
    %v496 = vpack.c.bf16 %v458, %v456
    %v497 = vpack.c.bf16 %v459, %v457
    %v498 = vpack.c.bf16 %v462, %v460
    %v499 = vpack.c.bf16 %v463, %v461
    %v500 = vpack.c.bf16 %v466, %v464
    %v501 = vpack.c.bf16 %v467, %v465
    %v502 = vpack.c.bf16 %v470, %v468
    %v503 = vpack.c.bf16 %v471, %v469
    %504 = vset.pattern.permute.xlu0 1
    %505 = vperm.xlu0 %504, %v22
    %v506 = vpop.permute.xlu0 %505
    %508 = vset.pattern.permute.xlu0 1
    %509 = vperm.xlu0 %508, %v23
    %v510 = vpop.permute.xlu0 %509
    %512 = vset.pattern.permute.xlu0 1
    %513 = vperm.xlu0 %512, %v24
    %v514 = vpop.permute.xlu0 %513
    %516 = vset.pattern.permute.xlu0 1
    %517 = vperm.xlu0 %516, %v25
    %v518 = vpop.permute.xlu0 %517
    %520 = vset.pattern.permute.xlu0 1
    %521 = vperm.xlu0 %520, %v26
    %v522 = vpop.permute.xlu0 %521
    %524 = vset.pattern.permute.xlu0 1
    %525 = vperm.xlu0 %524, %v27
    %v526 = vpop.permute.xlu0 %525
    %528 = vset.pattern.permute.xlu0 1
    %529 = vperm.xlu0 %528, %v28
    %v530 = vpop.permute.xlu0 %529
    %532 = vset.pattern.permute.xlu0 1
    %533 = vperm.xlu0 %532, %v29
    %v534 = vpop.permute.xlu0 %533
    %536 = vset.pattern.permute.xlu0 1
    %537 = vperm.xlu0 %536, %v30
    %v538 = vpop.permute.xlu0 %537
    %540 = vset.pattern.permute.xlu0 1
    %541 = vperm.xlu0 %540, %v31
    %v542 = vpop.permute.xlu0 %541
    %544 = vset.pattern.permute.xlu0 1
    %545 = vperm.xlu0 %544, %v32
    %v546 = vpop.permute.xlu0 %545
    %548 = vset.pattern.permute.xlu0 1
    %549 = vperm.xlu0 %548, %v33
    %v550 = vpop.permute.xlu0 %549
    %552 = vset.pattern.permute.xlu0 1
    %553 = vperm.xlu0 %552, %v34
    %v554 = vpop.permute.xlu0 %553
    %556 = vset.pattern.permute.xlu0 1
    %557 = vperm.xlu0 %556, %v35
    %v558 = vpop.permute.xlu0 %557
    %560 = vset.pattern.permute.xlu0 1
    %561 = vperm.xlu0 %560, %v36
    %v562 = vpop.permute.xlu0 %561
    %564 = vset.pattern.permute.xlu0 1
    %565 = vperm.xlu0 %564, %v37
    %v566 = vpop.permute.xlu0 %565
    %v584 = vunpack.c.l.b16 %v472
    %v585 = vunpack.c.l.b16 %v473
    %v586 = vunpack.c.l.b16 %v474
    %v587 = vunpack.c.l.b16 %v475
    %v588 = vunpack.c.l.b16 %v476
    %v589 = vunpack.c.l.b16 %v477
    %v590 = vunpack.c.l.b16 %v478
    %v591 = vunpack.c.l.b16 %v479
    %v592 = vunpack.c.l.b16 %v480
    %v593 = vunpack.c.l.b16 %v481
    %v594 = vunpack.c.l.b16 %v482
    %v595 = vunpack.c.l.b16 %v483
    %v596 = vunpack.c.l.b16 %v484
    %v597 = vunpack.c.l.b16 %v485
    %v598 = vunpack.c.l.b16 %v486
    %v599 = vunpack.c.l.b16 %v487
    %v600 = vpack.c.b16 %v585, %v584
    %v601 = vpack.c.b16 %v587, %v586
    %v602 = vpack.c.b16 %v589, %v588
    %v603 = vpack.c.b16 %v591, %v590
    %v604 = vpack.c.b16 %v593, %v592
    %v605 = vpack.c.b16 %v595, %v594
    %v606 = vpack.c.b16 %v597, %v596
    %v607 = vpack.c.b16 %v599, %v598
    %616 = vmatprep.subr.bf16.mxu0 %v503
    %617 = vmatpush1.bf16.msra.mxu0 %v502
    %618 = vmatprep.subr.bf16.mxu0 %v501
    %619 = vmatpush1.bf16.msra.mxu0 %v500
    %620 = vmatprep.subr.bf16.mxu0 %v499
    %621 = vmatpush1.bf16.msra.mxu0 %v498
    %622 = vmatprep.subr.bf16.mxu0 %v497
    %623 = vmatpush1.bf16.msra.mxu0 %v496
    %624 = vmatprep.subr.bf16.mxu0 %v495
    %625 = vmatpush1.bf16.msra.mxu0 %v494
    %626 = vmatprep.subr.bf16.mxu0 %v493
    %627 = vmatpush1.bf16.msra.mxu0 %v492
    %628 = vmatprep.subr.bf16.mxu0 %v491
    %629 = vmatpush1.bf16.msra.mxu0 %v490
    %630 = vmatprep.subr.bf16.mxu0 %v489
    %631 = vmatpush1.bf16.msra.mxu0 %v488
    %632 = vmatprep.subr.bf16.mxu0 0
    %633 = vmatpush2.bf16.msra.mxu0 0
    %634 = vmatprep.subr.bf16.mxu0 0
    %635 = vmatpush2.bf16.msra.mxu0 0
    %636 = vmatprep.subr.bf16.mxu0 0
    %637 = vmatpush2.bf16.msra.mxu0 0
    %638 = vmatprep.subr.bf16.mxu0 0
    %639 = vmatpush2.bf16.msra.mxu0 0
    %640 = vmatprep.subr.bf16.mxu0 0
    %641 = vmatpush2.bf16.msra.mxu0 0
    %642 = vmatprep.subr.bf16.mxu0 0
    %643 = vmatpush2.bf16.msra.mxu0 0
    %644 = vmatprep.subr.bf16.mxu0 0
    %645 = vmatpush2.bf16.msra.mxu0 0
    %646 = vmatprep.subr.bf16.mxu0 0
    %647 = vmatpush2.bf16.msra.mxu0 0
    %648 = vmatprep.mubr.bf16.mxu0 0
    %649 = vmatmul.mubr.bf16.gmra.mxu0 %v600
    %v650 = vpop.f32.mrf.mxu0
    %v651 = vadd.f32 %v506, %v650
    %v652 = vpop.f32.mrf.mxu0
    %v653 = vadd.f32 %v506, %v652
    %v654 = vpop.f32.mrf.mxu0
    %v655 = vadd.f32 %v510, %v654
    %v656 = vpop.f32.mrf.mxu0
    %v657 = vadd.f32 %v510, %v656
    %658 = vmatprep.mubr.bf16.mxu0 0
    %659 = vmatmul.mubr.bf16.gmra.mxu0 %v601
    %v660 = vpop.f32.mrf.mxu0
    %v661 = vadd.f32 %v514, %v660
    %v662 = vpop.f32.mrf.mxu0
    %v663 = vadd.f32 %v514, %v662
    %v664 = vpop.f32.mrf.mxu0
    %v665 = vadd.f32 %v518, %v664
    %v666 = vpop.f32.mrf.mxu0
    %v667 = vadd.f32 %v518, %v666
    %668 = vmatprep.mubr.bf16.mxu0 0
    %669 = vmatmul.mubr.bf16.gmra.mxu0 %v602
    %v670 = vpop.f32.mrf.mxu0
    %v671 = vadd.f32 %v522, %v670
    %v672 = vpop.f32.mrf.mxu0
    %v673 = vadd.f32 %v522, %v672
    %v674 = vpop.f32.mrf.mxu0
    %v675 = vadd.f32 %v526, %v674
    %v676 = vpop.f32.mrf.mxu0
    %v677 = vadd.f32 %v526, %v676
    %678 = vmatprep.mubr.bf16.mxu0 0
    %679 = vmatmul.mubr.bf16.gmra.mxu0 %v603
    %v680 = vpop.f32.mrf.mxu0
    %v681 = vadd.f32 %v530, %v680
    %v682 = vpop.f32.mrf.mxu0
    %v683 = vadd.f32 %v530, %v682
    %v684 = vpop.f32.mrf.mxu0
    %v685 = vadd.f32 %v534, %v684
    %v686 = vpop.f32.mrf.mxu0
    %v687 = vadd.f32 %v534, %v686
    %688 = vmatprep.mubr.bf16.mxu0 0
    %689 = vmatmul.mubr.bf16.gmra.mxu0 %v604
    %v690 = vpop.f32.mrf.mxu0
    %v691 = vadd.f32 %v538, %v690
    %v692 = vpop.f32.mrf.mxu0
    %v693 = vadd.f32 %v538, %v692
    %v694 = vpop.f32.mrf.mxu0
    %v695 = vadd.f32 %v542, %v694
    %v696 = vpop.f32.mrf.mxu0
    %v697 = vadd.f32 %v542, %v696
    %698 = vmatprep.mubr.bf16.mxu0 0
    %699 = vmatmul.mubr.bf16.gmra.mxu0 %v605
    %v700 = vpop.f32.mrf.mxu0
    %v701 = vadd.f32 %v546, %v700
    %v702 = vpop.f32.mrf.mxu0
    %v703 = vadd.f32 %v546, %v702
    %v704 = vpop.f32.mrf.mxu0
    %v705 = vadd.f32 %v550, %v704
    %v706 = vpop.f32.mrf.mxu0
    %v707 = vadd.f32 %v550, %v706
    %708 = vmatprep.mubr.bf16.mxu0 0
    %709 = vmatmul.mubr.bf16.gmra.mxu0 %v606
    %v710 = vpop.f32.mrf.mxu0
    %v711 = vadd.f32 %v554, %v710
    %v712 = vpop.f32.mrf.mxu0
    %v713 = vadd.f32 %v554, %v712
    %v714 = vpop.f32.mrf.mxu0
    %v715 = vadd.f32 %v558, %v714
    %v716 = vpop.f32.mrf.mxu0
    %v717 = vadd.f32 %v558, %v716
    %718 = vmatprep.mubr.bf16.mxu0 0
    %719 = vmatmul.mubr.bf16.gmra.mxu0 %v607
    %v720 = vpop.f32.mrf.mxu0
    %v721 = vadd.f32 %v562, %v720
    %v722 = vpop.f32.mrf.mxu0
    %v723 = vadd.f32 %v562, %v722
    %v724 = vpop.f32.mrf.mxu0
    %v725 = vadd.f32 %v566, %v724
    %v726 = vpop.f32.mrf.mxu0
    %v727 = vadd.f32 %v566, %v726
    %728 = vdwg.mxu0
    %v729 = vmul.f32 %v651, 0.1
    %v730 = vmul.f32 %v653, 0.1
    %v731 = vmul.f32 %v655, 0.1
    %v732 = vmul.f32 %v657, 0.1
    %v733 = vmul.f32 %v661, 0.1
    %v734 = vmul.f32 %v663, 0.1
    %v735 = vmul.f32 %v665, 0.1
    %v736 = vmul.f32 %v667, 0.1
    %v737 = vmul.f32 %v671, 0.1
    %v738 = vmul.f32 %v673, 0.1
    %v739 = vmul.f32 %v675, 0.1
    %v740 = vmul.f32 %v677, 0.1
    %v741 = vmul.f32 %v681, 0.1
    %v742 = vmul.f32 %v683, 0.1
    %v743 = vmul.f32 %v685, 0.1
    %v744 = vmul.f32 %v687, 0.1
    %v745 = vmul.f32 %v691, 0.1
    %v746 = vmul.f32 %v693, 0.1
    %v747 = vmul.f32 %v695, 0.1
    %v748 = vmul.f32 %v697, 0.1
    %v749 = vmul.f32 %v701, 0.1
    %v750 = vmul.f32 %v703, 0.1
    %v751 = vmul.f32 %v705, 0.1
    %v752 = vmul.f32 %v707, 0.1
    %v753 = vmul.f32 %v711, 0.1
    %v754 = vmul.f32 %v713, 0.1
    %v755 = vmul.f32 %v715, 0.1
    %v756 = vmul.f32 %v717, 0.1
    %v757 = vmul.f32 %v721, 0.1
    %v758 = vmul.f32 %v723, 0.1
    %v759 = vmul.f32 %v725, 0.1
    %v760 = vmul.f32 %v727, 0.1
    %v761 = vmax.f32 %v651, %v729
    %v762 = vmax.f32 %v653, %v730
    %v763 = vmax.f32 %v655, %v731
    %v764 = vmax.f32 %v657, %v732
    %v765 = vmax.f32 %v661, %v733
    %v766 = vmax.f32 %v663, %v734
    %v767 = vmax.f32 %v665, %v735
    %v768 = vmax.f32 %v667, %v736
    %v769 = vmax.f32 %v671, %v737
    %v770 = vmax.f32 %v673, %v738
    %v771 = vmax.f32 %v675, %v739
    %v772 = vmax.f32 %v677, %v740
    %v773 = vmax.f32 %v681, %v741
    %v774 = vmax.f32 %v683, %v742
    %v775 = vmax.f32 %v685, %v743
    %v776 = vmax.f32 %v687, %v744
    %v777 = vmax.f32 %v691, %v745
    %v778 = vmax.f32 %v693, %v746
    %v779 = vmax.f32 %v695, %v747
    %v780 = vmax.f32 %v697, %v748
    %v781 = vmax.f32 %v701, %v749
    %v782 = vmax.f32 %v703, %v750
    %v783 = vmax.f32 %v705, %v751
    %v784 = vmax.f32 %v707, %v752
    %v785 = vmax.f32 %v711, %v753
    %v786 = vmax.f32 %v713, %v754
    %v787 = vmax.f32 %v715, %v755
    %v788 = vmax.f32 %v717, %v756
    %v789 = vmax.f32 %v721, %v757
    %v790 = vmax.f32 %v723, %v758
    %v791 = vmax.f32 %v725, %v759
    %v792 = vmax.f32 %v727, %v760
    %s793 = scalar_lea.vmem %s2, 64
    %v794 = vld [vmem:[%s793] sm:$0xf]
    %v795 = vld [vmem:[%s793 + $0x4] sm:$0xf]
    %v796 = vld [vmem:[%s793 + $0x8] sm:$0xf]
    %v797 = vld [vmem:[%s793 + $0xc] sm:$0xf]
    %v798 = vld [vmem:[%s793 + $0x10] sm:$0xf]
    %v799 = vld [vmem:[%s793 + $0x14] sm:$0xf]
    %v800 = vld [vmem:[%s793 + $0x18] sm:$0xf]
    %v801 = vld [vmem:[%s793 + $0x1c] sm:$0xf]
    %v802 = vld [vmem:[%s793 + $0x20] sm:$0xf]
    %v803 = vld [vmem:[%s793 + $0x24] sm:$0xf]
    %v804 = vld [vmem:[%s793 + $0x28] sm:$0xf]
    %v805 = vld [vmem:[%s793 + $0x2c] sm:$0xf]
    %v806 = vld [vmem:[%s793 + $0x30] sm:$0xf]
    %v807 = vld [vmem:[%s793 + $0x34] sm:$0xf]
    %v808 = vld [vmem:[%s793 + $0x38] sm:$0xf]
    %v809 = vld [vmem:[%s793 + $0x3c] sm:$0xf]
    %v810 = vpack.c.bf16 %v763, %v761
    %v811 = vpack.c.bf16 %v764, %v762
    %v812 = vpack.c.bf16 %v767, %v765
    %v813 = vpack.c.bf16 %v768, %v766
    %v814 = vpack.c.bf16 %v771, %v769
    %v815 = vpack.c.bf16 %v772, %v770
    %v816 = vpack.c.bf16 %v775, %v773
    %v817 = vpack.c.bf16 %v776, %v774
    %v818 = vpack.c.bf16 %v779, %v777
    %v819 = vpack.c.bf16 %v780, %v778
    %v820 = vpack.c.bf16 %v783, %v781
    %v821 = vpack.c.bf16 %v784, %v782
    %v822 = vpack.c.bf16 %v787, %v785
    %v823 = vpack.c.bf16 %v788, %v786
    %v824 = vpack.c.bf16 %v791, %v789
    %v825 = vpack.c.bf16 %v792, %v790
    %826 = vset.pattern.permute.xlu0 2
    %827 = vperm.xlu0 %826, %v22
    %v828 = vpop.permute.xlu0 %827
    %830 = vset.pattern.permute.xlu0 2
    %831 = vperm.xlu0 %830, %v23
    %v832 = vpop.permute.xlu0 %831
    %834 = vset.pattern.permute.xlu0 2
    %835 = vperm.xlu0 %834, %v24
    %v836 = vpop.permute.xlu0 %835
    %838 = vset.pattern.permute.xlu0 2
    %839 = vperm.xlu0 %838, %v25
    %v840 = vpop.permute.xlu0 %839
    %842 = vset.pattern.permute.xlu0 2
    %843 = vperm.xlu0 %842, %v26
    %v844 = vpop.permute.xlu0 %843
    %846 = vset.pattern.permute.xlu0 2
    %847 = vperm.xlu0 %846, %v27
    %v848 = vpop.permute.xlu0 %847
    %850 = vset.pattern.permute.xlu0 2
    %851 = vperm.xlu0 %850, %v28
    %v852 = vpop.permute.xlu0 %851
    %854 = vset.pattern.permute.xlu0 2
    %855 = vperm.xlu0 %854, %v29
    %v856 = vpop.permute.xlu0 %855
    %858 = vset.pattern.permute.xlu0 2
    %859 = vperm.xlu0 %858, %v30
    %v860 = vpop.permute.xlu0 %859
    %862 = vset.pattern.permute.xlu0 2
    %863 = vperm.xlu0 %862, %v31
    %v864 = vpop.permute.xlu0 %863
    %866 = vset.pattern.permute.xlu0 2
    %867 = vperm.xlu0 %866, %v32
    %v868 = vpop.permute.xlu0 %867
    %870 = vset.pattern.permute.xlu0 2
    %871 = vperm.xlu0 %870, %v33
    %v872 = vpop.permute.xlu0 %871
    %874 = vset.pattern.permute.xlu0 2
    %875 = vperm.xlu0 %874, %v34
    %v876 = vpop.permute.xlu0 %875
    %878 = vset.pattern.permute.xlu0 2
    %879 = vperm.xlu0 %878, %v35
    %v880 = vpop.permute.xlu0 %879
    %882 = vset.pattern.permute.xlu0 2
    %883 = vperm.xlu0 %882, %v36
    %v884 = vpop.permute.xlu0 %883
    %886 = vset.pattern.permute.xlu0 2
    %887 = vperm.xlu0 %886, %v37
    %v888 = vpop.permute.xlu0 %887
    %v906 = vunpack.c.l.b16 %v794
    %v907 = vunpack.c.l.b16 %v795
    %v908 = vunpack.c.l.b16 %v796
    %v909 = vunpack.c.l.b16 %v797
    %v910 = vunpack.c.l.b16 %v798
    %v911 = vunpack.c.l.b16 %v799
    %v912 = vunpack.c.l.b16 %v800
    %v913 = vunpack.c.l.b16 %v801
    %v914 = vunpack.c.l.b16 %v802
    %v915 = vunpack.c.l.b16 %v803
    %v916 = vunpack.c.l.b16 %v804
    %v917 = vunpack.c.l.b16 %v805
    %v918 = vunpack.c.l.b16 %v806
    %v919 = vunpack.c.l.b16 %v807
    %v920 = vunpack.c.l.b16 %v808
    %v921 = vunpack.c.l.b16 %v809
    %v922 = vpack.c.b16 %v907, %v906
    %v923 = vpack.c.b16 %v909, %v908
    %v924 = vpack.c.b16 %v911, %v910
    %v925 = vpack.c.b16 %v913, %v912
    %v926 = vpack.c.b16 %v915, %v914
    %v927 = vpack.c.b16 %v917, %v916
    %v928 = vpack.c.b16 %v919, %v918
    %v929 = vpack.c.b16 %v921, %v920
    %938 = vmatprep.subr.bf16.mxu0 %v825
    %939 = vmatpush1.bf16.msra.mxu0 %v824
    %940 = vmatprep.subr.bf16.mxu0 %v823
    %941 = vmatpush1.bf16.msra.mxu0 %v822
    %942 = vmatprep.subr.bf16.mxu0 %v821
    %943 = vmatpush1.bf16.msra.mxu0 %v820
    %944 = vmatprep.subr.bf16.mxu0 %v819
    %945 = vmatpush1.bf16.msra.mxu0 %v818
    %946 = vmatprep.subr.bf16.mxu0 %v817
    %947 = vmatpush1.bf16.msra.mxu0 %v816
    %948 = vmatprep.subr.bf16.mxu0 %v815
    %949 = vmatpush1.bf16.msra.mxu0 %v814
    %950 = vmatprep.subr.bf16.mxu0 %v813
    %951 = vmatpush1.bf16.msra.mxu0 %v812
    %952 = vmatprep.subr.bf16.mxu0 %v811
    %953 = vmatpush1.bf16.msra.mxu0 %v810
    %954 = vmatprep.subr.bf16.mxu0 0
    %955 = vmatpush2.bf16.msra.mxu0 0
    %956 = vmatprep.subr.bf16.mxu0 0
    %957 = vmatpush2.bf16.msra.mxu0 0
    %958 = vmatprep.subr.bf16.mxu0 0
    %959 = vmatpush2.bf16.msra.mxu0 0
    %960 = vmatprep.subr.bf16.mxu0 0
    %961 = vmatpush2.bf16.msra.mxu0 0
    %962 = vmatprep.subr.bf16.mxu0 0
    %963 = vmatpush2.bf16.msra.mxu0 0
    %964 = vmatprep.subr.bf16.mxu0 0
    %965 = vmatpush2.bf16.msra.mxu0 0
    %966 = vmatprep.subr.bf16.mxu0 0
    %967 = vmatpush2.bf16.msra.mxu0 0
    %968 = vmatprep.subr.bf16.mxu0 0
    %969 = vmatpush2.bf16.msra.mxu0 0
    %970 = vmatprep.mubr.bf16.mxu0 0
    %971 = vmatmul.mubr.bf16.gmra.mxu0 %v922
    %v972 = vpop.f32.mrf.mxu0
    %v973 = vadd.f32 %v828, %v972
    %v974 = vpop.f32.mrf.mxu0
    %v975 = vadd.f32 %v828, %v974
    %v976 = vpop.f32.mrf.mxu0
    %v977 = vadd.f32 %v832, %v976
    %v978 = vpop.f32.mrf.mxu0
    %v979 = vadd.f32 %v832, %v978
    %980 = vmatprep.mubr.bf16.mxu0 0
    %981 = vmatmul.mubr.bf16.gmra.mxu0 %v923
    %v982 = vpop.f32.mrf.mxu0
    %v983 = vadd.f32 %v836, %v982
    %v984 = vpop.f32.mrf.mxu0
    %v985 = vadd.f32 %v836, %v984
    %v986 = vpop.f32.mrf.mxu0
    %v987 = vadd.f32 %v840, %v986
    %v988 = vpop.f32.mrf.mxu0
    %v989 = vadd.f32 %v840, %v988
    %990 = vmatprep.mubr.bf16.mxu0 0
    %991 = vmatmul.mubr.bf16.gmra.mxu0 %v924
    %v992 = vpop.f32.mrf.mxu0
    %v993 = vadd.f32 %v844, %v992
    %v994 = vpop.f32.mrf.mxu0
    %v995 = vadd.f32 %v844, %v994
    %v996 = vpop.f32.mrf.mxu0
    %v997 = vadd.f32 %v848, %v996
    %v998 = vpop.f32.mrf.mxu0
    %v999 = vadd.f32 %v848, %v998
    %1000 = vmatprep.mubr.bf16.mxu0 0
    %1001 = vmatmul.mubr.bf16.gmra.mxu0 %v925
    %v1002 = vpop.f32.mrf.mxu0
    %v1003 = vadd.f32 %v852, %v1002
    %v1004 = vpop.f32.mrf.mxu0
    %v1005 = vadd.f32 %v852, %v1004
    %v1006 = vpop.f32.mrf.mxu0
    %v1007 = vadd.f32 %v856, %v1006
    %v1008 = vpop.f32.mrf.mxu0
    %v1009 = vadd.f32 %v856, %v1008
    %1010 = vmatprep.mubr.bf16.mxu0 0
    %1011 = vmatmul.mubr.bf16.gmra.mxu0 %v926
    %v1012 = vpop.f32.mrf.mxu0
    %v1013 = vadd.f32 %v860, %v1012
    %v1014 = vpop.f32.mrf.mxu0
    %v1015 = vadd.f32 %v860, %v1014
    %v1016 = vpop.f32.mrf.mxu0
    %v1017 = vadd.f32 %v864, %v1016
    %v1018 = vpop.f32.mrf.mxu0
    %v1019 = vadd.f32 %v864, %v1018
    %1020 = vmatprep.mubr.bf16.mxu0 0
    %1021 = vmatmul.mubr.bf16.gmra.mxu0 %v927
    %v1022 = vpop.f32.mrf.mxu0
    %v1023 = vadd.f32 %v868, %v1022
    %v1024 = vpop.f32.mrf.mxu0
    %v1025 = vadd.f32 %v868, %v1024
    %v1026 = vpop.f32.mrf.mxu0
    %v1027 = vadd.f32 %v872, %v1026
    %v1028 = vpop.f32.mrf.mxu0
    %v1029 = vadd.f32 %v872, %v1028
    %1030 = vmatprep.mubr.bf16.mxu0 0
    %1031 = vmatmul.mubr.bf16.gmra.mxu0 %v928
    %v1032 = vpop.f32.mrf.mxu0
    %v1033 = vadd.f32 %v876, %v1032
    %v1034 = vpop.f32.mrf.mxu0
    %v1035 = vadd.f32 %v876, %v1034
    %v1036 = vpop.f32.mrf.mxu0
    %v1037 = vadd.f32 %v880, %v1036
    %v1038 = vpop.f32.mrf.mxu0
    %v1039 = vadd.f32 %v880, %v1038
    %1040 = vmatprep.mubr.bf16.mxu0 0
    %1041 = vmatmul.mubr.bf16.gmra.mxu0 %v929
    %v1042 = vpop.f32.mrf.mxu0
    %v1043 = vadd.f32 %v884, %v1042
    %v1044 = vpop.f32.mrf.mxu0
    %v1045 = vadd.f32 %v884, %v1044
    %v1046 = vpop.f32.mrf.mxu0
    %v1047 = vadd.f32 %v888, %v1046
    %v1048 = vpop.f32.mrf.mxu0
    %v1049 = vadd.f32 %v888, %v1048
    %1050 = vdwg.mxu0
    %v1051 = vmul.f32 %v973, 0.1
    %v1052 = vmul.f32 %v975, 0.1
    %v1053 = vmul.f32 %v977, 0.1
    %v1054 = vmul.f32 %v979, 0.1
    %v1055 = vmul.f32 %v983, 0.1
    %v1056 = vmul.f32 %v985, 0.1
    %v1057 = vmul.f32 %v987, 0.1
    %v1058 = vmul.f32 %v989, 0.1
    %v1059 = vmul.f32 %v993, 0.1
    %v1060 = vmul.f32 %v995, 0.1
    %v1061 = vmul.f32 %v997, 0.1
    %v1062 = vmul.f32 %v999, 0.1
    %v1063 = vmul.f32 %v1003, 0.1
    %v1064 = vmul.f32 %v1005, 0.1
    %v1065 = vmul.f32 %v1007, 0.1
    %v1066 = vmul.f32 %v1009, 0.1
    %v1067 = vmul.f32 %v1013, 0.1
    %v1068 = vmul.f32 %v1015, 0.1
    %v1069 = vmul.f32 %v1017, 0.1
    %v1070 = vmul.f32 %v1019, 0.1
    %v1071 = vmul.f32 %v1023, 0.1
    %v1072 = vmul.f32 %v1025, 0.1
    %v1073 = vmul.f32 %v1027, 0.1
    %v1074 = vmul.f32 %v1029, 0.1
    %v1075 = vmul.f32 %v1033, 0.1
    %v1076 = vmul.f32 %v1035, 0.1
    %v1077 = vmul.f32 %v1037, 0.1
    %v1078 = vmul.f32 %v1039, 0.1
    %v1079 = vmul.f32 %v1043, 0.1
    %v1080 = vmul.f32 %v1045, 0.1
    %v1081 = vmul.f32 %v1047, 0.1
    %v1082 = vmul.f32 %v1049, 0.1
    %v1083 = vmax.f32 %v973, %v1051
    %v1084 = vmax.f32 %v975, %v1052
    %v1085 = vmax.f32 %v977, %v1053
    %v1086 = vmax.f32 %v979, %v1054
    %v1087 = vmax.f32 %v983, %v1055
    %v1088 = vmax.f32 %v985, %v1056
    %v1089 = vmax.f32 %v987, %v1057
    %v1090 = vmax.f32 %v989, %v1058
    %v1091 = vmax.f32 %v993, %v1059
    %v1092 = vmax.f32 %v995, %v1060
    %v1093 = vmax.f32 %v997, %v1061
    %v1094 = vmax.f32 %v999, %v1062
    %v1095 = vmax.f32 %v1003, %v1063
    %v1096 = vmax.f32 %v1005, %v1064
    %v1097 = vmax.f32 %v1007, %v1065
    %v1098 = vmax.f32 %v1009, %v1066
    %v1099 = vmax.f32 %v1013, %v1067
    %v1100 = vmax.f32 %v1015, %v1068
    %v1101 = vmax.f32 %v1017, %v1069
    %v1102 = vmax.f32 %v1019, %v1070
    %v1103 = vmax.f32 %v1023, %v1071
    %v1104 = vmax.f32 %v1025, %v1072
    %v1105 = vmax.f32 %v1027, %v1073
    %v1106 = vmax.f32 %v1029, %v1074
    %v1107 = vmax.f32 %v1033, %v1075
    %v1108 = vmax.f32 %v1035, %v1076
    %v1109 = vmax.f32 %v1037, %v1077
    %v1110 = vmax.f32 %v1039, %v1078
    %v1111 = vmax.f32 %v1043, %v1079
    %v1112 = vmax.f32 %v1045, %v1080
    %v1113 = vmax.f32 %v1047, %v1081
    %v1114 = vmax.f32 %v1049, %v1082
    %s1115 = scalar_lea.vmem %s2, 128
    %v1116 = vld [vmem:[%s1115] sm:$0xf]
    %v1117 = vld [vmem:[%s1115 + $0x4] sm:$0xf]
    %v1118 = vld [vmem:[%s1115 + $0x8] sm:$0xf]
    %v1119 = vld [vmem:[%s1115 + $0xc] sm:$0xf]
    %v1120 = vld [vmem:[%s1115 + $0x10] sm:$0xf]
    %v1121 = vld [vmem:[%s1115 + $0x14] sm:$0xf]
    %v1122 = vld [vmem:[%s1115 + $0x18] sm:$0xf]
    %v1123 = vld [vmem:[%s1115 + $0x1c] sm:$0xf]
    %v1124 = vld [vmem:[%s1115 + $0x20] sm:$0xf]
    %v1125 = vld [vmem:[%s1115 + $0x24] sm:$0xf]
    %v1126 = vld [vmem:[%s1115 + $0x28] sm:$0xf]
    %v1127 = vld [vmem:[%s1115 + $0x2c] sm:$0xf]
    %v1128 = vld [vmem:[%s1115 + $0x30] sm:$0xf]
    %v1129 = vld [vmem:[%s1115 + $0x34] sm:$0xf]
    %v1130 = vld [vmem:[%s1115 + $0x38] sm:$0xf]
    %v1131 = vld [vmem:[%s1115 + $0x3c] sm:$0xf]
    %v1132 = vpack.c.bf16 %v1085, %v1083
    %v1133 = vpack.c.bf16 %v1086, %v1084
    %v1134 = vpack.c.bf16 %v1089, %v1087
    %v1135 = vpack.c.bf16 %v1090, %v1088
    %v1136 = vpack.c.bf16 %v1093, %v1091
    %v1137 = vpack.c.bf16 %v1094, %v1092
    %v1138 = vpack.c.bf16 %v1097, %v1095
    %v1139 = vpack.c.bf16 %v1098, %v1096
    %v1140 = vpack.c.bf16 %v1101, %v1099
    %v1141 = vpack.c.bf16 %v1102, %v1100
    %v1142 = vpack.c.bf16 %v1105, %v1103
    %v1143 = vpack.c.bf16 %v1106, %v1104
    %v1144 = vpack.c.bf16 %v1109, %v1107
    %v1145 = vpack.c.bf16 %v1110, %v1108
    %v1146 = vpack.c.bf16 %v1113, %v1111
    %v1147 = vpack.c.bf16 %v1114, %v1112
    %1148 = vset.pattern.permute.xlu0 3
    %1149 = vperm.xlu0 %1148, %v22
    %v1150 = vpop.permute.xlu0 %1149
    %1152 = vset.pattern.permute.xlu0 3
    %1153 = vperm.xlu0 %1152, %v23
    %v1154 = vpop.permute.xlu0 %1153
    %1156 = vset.pattern.permute.xlu0 3
    %1157 = vperm.xlu0 %1156, %v24
    %v1158 = vpop.permute.xlu0 %1157
    %1160 = vset.pattern.permute.xlu0 3
    %1161 = vperm.xlu0 %1160, %v25
    %v1162 = vpop.permute.xlu0 %1161
    %1164 = vset.pattern.permute.xlu0 3
    %1165 = vperm.xlu0 %1164, %v26
    %v1166 = vpop.permute.xlu0 %1165
    %1168 = vset.pattern.permute.xlu0 3
    %1169 = vperm.xlu0 %1168, %v27
    %v1170 = vpop.permute.xlu0 %1169
    %1172 = vset.pattern.permute.xlu0 3
    %1173 = vperm.xlu0 %1172, %v28
    %v1174 = vpop.permute.xlu0 %1173
    %1176 = vset.pattern.permute.xlu0 3
    %1177 = vperm.xlu0 %1176, %v29
    %v1178 = vpop.permute.xlu0 %1177
    %1180 = vset.pattern.permute.xlu0 3
    %1181 = vperm.xlu0 %1180, %v30
    %v1182 = vpop.permute.xlu0 %1181
    %1184 = vset.pattern.permute.xlu0 3
    %1185 = vperm.xlu0 %1184, %v31
    %v1186 = vpop.permute.xlu0 %1185
    %1188 = vset.pattern.permute.xlu0 3
    %1189 = vperm.xlu0 %1188, %v32
    %v1190 = vpop.permute.xlu0 %1189
    %1192 = vset.pattern.permute.xlu0 3
    %1193 = vperm.xlu0 %1192, %v33
    %v1194 = vpop.permute.xlu0 %1193
    %1196 = vset.pattern.permute.xlu0 3
    %1197 = vperm.xlu0 %1196, %v34
    %v1198 = vpop.permute.xlu0 %1197
    %1200 = vset.pattern.permute.xlu0 3
    %1201 = vperm.xlu0 %1200, %v35
    %v1202 = vpop.permute.xlu0 %1201
    %1204 = vset.pattern.permute.xlu0 3
    %1205 = vperm.xlu0 %1204, %v36
    %v1206 = vpop.permute.xlu0 %1205
    %1208 = vset.pattern.permute.xlu0 3
    %1209 = vperm.xlu0 %1208, %v37
    %v1210 = vpop.permute.xlu0 %1209
    %v1228 = vunpack.c.l.b16 %v1116
    %v1229 = vunpack.c.l.b16 %v1117
    %v1230 = vunpack.c.l.b16 %v1118
    %v1231 = vunpack.c.l.b16 %v1119
    %v1232 = vunpack.c.l.b16 %v1120
    %v1233 = vunpack.c.l.b16 %v1121
    %v1234 = vunpack.c.l.b16 %v1122
    %v1235 = vunpack.c.l.b16 %v1123
    %v1236 = vunpack.c.l.b16 %v1124
    %v1237 = vunpack.c.l.b16 %v1125
    %v1238 = vunpack.c.l.b16 %v1126
    %v1239 = vunpack.c.l.b16 %v1127
    %v1240 = vunpack.c.l.b16 %v1128
    %v1241 = vunpack.c.l.b16 %v1129
    %v1242 = vunpack.c.l.b16 %v1130
    %v1243 = vunpack.c.l.b16 %v1131
    %v1244 = vpack.c.b16 %v1229, %v1228
    %v1245 = vpack.c.b16 %v1231, %v1230
    %v1246 = vpack.c.b16 %v1233, %v1232
    %v1247 = vpack.c.b16 %v1235, %v1234
    %v1248 = vpack.c.b16 %v1237, %v1236
    %v1249 = vpack.c.b16 %v1239, %v1238
    %v1250 = vpack.c.b16 %v1241, %v1240
    %v1251 = vpack.c.b16 %v1243, %v1242
    %1260 = vmatprep.subr.bf16.mxu0 %v1147
    %1261 = vmatpush1.bf16.msra.mxu0 %v1146
    %1262 = vmatprep.subr.bf16.mxu0 %v1145
    %1263 = vmatpush1.bf16.msra.mxu0 %v1144
    %1264 = vmatprep.subr.bf16.mxu0 %v1143
    %1265 = vmatpush1.bf16.msra.mxu0 %v1142
    %1266 = vmatprep.subr.bf16.mxu0 %v1141
    %1267 = vmatpush1.bf16.msra.mxu0 %v1140
    %1268 = vmatprep.subr.bf16.mxu0 %v1139
    %1269 = vmatpush1.bf16.msra.mxu0 %v1138
    %1270 = vmatprep.subr.bf16.mxu0 %v1137
    %1271 = vmatpush1.bf16.msra.mxu0 %v1136
    %1272 = vmatprep.subr.bf16.mxu0 %v1135
    %1273 = vmatpush1.bf16.msra.mxu0 %v1134
    %1274 = vmatprep.subr.bf16.mxu0 %v1133
    %1275 = vmatpush1.bf16.msra.mxu0 %v1132
    %1276 = vmatprep.subr.bf16.mxu0 0
    %1277 = vmatpush2.bf16.msra.mxu0 0
    %1278 = vmatprep.subr.bf16.mxu0 0
    %1279 = vmatpush2.bf16.msra.mxu0 0
    %1280 = vmatprep.subr.bf16.mxu0 0
    %1281 = vmatpush2.bf16.msra.mxu0 0
    %1282 = vmatprep.subr.bf16.mxu0 0
    %1283 = vmatpush2.bf16.msra.mxu0 0
    %1284 = vmatprep.subr.bf16.mxu0 0
    %1285 = vmatpush2.bf16.msra.mxu0 0
    %1286 = vmatprep.subr.bf16.mxu0 0
    %1287 = vmatpush2.bf16.msra.mxu0 0
    %1288 = vmatprep.subr.bf16.mxu0 0
    %1289 = vmatpush2.bf16.msra.mxu0 0
    %1290 = vmatprep.subr.bf16.mxu0 0
    %1291 = vmatpush2.bf16.msra.mxu0 0
    %1292 = vmatprep.mubr.bf16.mxu0 0
    %1293 = vmatmul.mubr.bf16.gmra.mxu0 %v1244
    %v1294 = vpop.f32.mrf.mxu0
    %v1295 = vadd.f32 %v1150, %v1294
    %v1296 = vpop.f32.mrf.mxu0
    %v1297 = vadd.f32 %v1150, %v1296
    %v1298 = vpop.f32.mrf.mxu0
    %v1299 = vadd.f32 %v1154, %v1298
    %v1300 = vpop.f32.mrf.mxu0
    %v1301 = vadd.f32 %v1154, %v1300
    %1302 = vmatprep.mubr.bf16.mxu0 0
    %1303 = vmatmul.mubr.bf16.gmra.mxu0 %v1245
    %v1304 = vpop.f32.mrf.mxu0
    %v1305 = vadd.f32 %v1158, %v1304
    %v1306 = vpop.f32.mrf.mxu0
    %v1307 = vadd.f32 %v1158, %v1306
    %v1308 = vpop.f32.mrf.mxu0
    %v1309 = vadd.f32 %v1162, %v1308
    %v1310 = vpop.f32.mrf.mxu0
    %v1311 = vadd.f32 %v1162, %v1310
    %1312 = vmatprep.mubr.bf16.mxu0 0
    %1313 = vmatmul.mubr.bf16.gmra.mxu0 %v1246
    %v1314 = vpop.f32.mrf.mxu0
    %v1315 = vadd.f32 %v1166, %v1314
    %v1316 = vpop.f32.mrf.mxu0
    %v1317 = vadd.f32 %v1166, %v1316
    %v1318 = vpop.f32.mrf.mxu0
    %v1319 = vadd.f32 %v1170, %v1318
    %v1320 = vpop.f32.mrf.mxu0
    %v1321 = vadd.f32 %v1170, %v1320
    %1322 = vmatprep.mubr.bf16.mxu0 0
    %1323 = vmatmul.mubr.bf16.gmra.mxu0 %v1247
    %v1324 = vpop.f32.mrf.mxu0
    %v1325 = vadd.f32 %v1174, %v1324
    %v1326 = vpop.f32.mrf.mxu0
    %v1327 = vadd.f32 %v1174, %v1326
    %v1328 = vpop.f32.mrf.mxu0
    %v1329 = vadd.f32 %v1178, %v1328
    %v1330 = vpop.f32.mrf.mxu0
    %v1331 = vadd.f32 %v1178, %v1330
    %1332 = vmatprep.mubr.bf16.mxu0 0
    %1333 = vmatmul.mubr.bf16.gmra.mxu0 %v1248
    %v1334 = vpop.f32.mrf.mxu0
    %v1335 = vadd.f32 %v1182, %v1334
    %v1336 = vpop.f32.mrf.mxu0
    %v1337 = vadd.f32 %v1182, %v1336
    %v1338 = vpop.f32.mrf.mxu0
    %v1339 = vadd.f32 %v1186, %v1338
    %v1340 = vpop.f32.mrf.mxu0
    %v1341 = vadd.f32 %v1186, %v1340
    %1342 = vmatprep.mubr.bf16.mxu0 0
    %1343 = vmatmul.mubr.bf16.gmra.mxu0 %v1249
    %v1344 = vpop.f32.mrf.mxu0
    %v1345 = vadd.f32 %v1190, %v1344
    %v1346 = vpop.f32.mrf.mxu0
    %v1347 = vadd.f32 %v1190, %v1346
    %v1348 = vpop.f32.mrf.mxu0
    %v1349 = vadd.f32 %v1194, %v1348
    %v1350 = vpop.f32.mrf.mxu0
    %v1351 = vadd.f32 %v1194, %v1350
    %1352 = vmatprep.mubr.bf16.mxu0 0
    %1353 = vmatmul.mubr.bf16.gmra.mxu0 %v1250
    %v1354 = vpop.f32.mrf.mxu0
    %v1355 = vadd.f32 %v1198, %v1354
    %v1356 = vpop.f32.mrf.mxu0
    %v1357 = vadd.f32 %v1198, %v1356
    %v1358 = vpop.f32.mrf.mxu0
    %v1359 = vadd.f32 %v1202, %v1358
    %v1360 = vpop.f32.mrf.mxu0
    %v1361 = vadd.f32 %v1202, %v1360
    %1362 = vmatprep.mubr.bf16.mxu0 0
    %1363 = vmatmul.mubr.bf16.gmra.mxu0 %v1251
    %v1364 = vpop.f32.mrf.mxu0
    %v1365 = vadd.f32 %v1206, %v1364
    %v1366 = vpop.f32.mrf.mxu0
    %v1367 = vadd.f32 %v1206, %v1366
    %v1368 = vpop.f32.mrf.mxu0
    %v1369 = vadd.f32 %v1210, %v1368
    %v1370 = vpop.f32.mrf.mxu0
    %v1371 = vadd.f32 %v1210, %v1370
    %1372 = vdwg.mxu0
    %v1373 = vmul.f32 %v1295, 0.1
    %v1374 = vmul.f32 %v1297, 0.1
    %v1375 = vmul.f32 %v1299, 0.1
    %v1376 = vmul.f32 %v1301, 0.1
    %v1377 = vmul.f32 %v1305, 0.1
    %v1378 = vmul.f32 %v1307, 0.1
    %v1379 = vmul.f32 %v1309, 0.1
    %v1380 = vmul.f32 %v1311, 0.1
    %v1381 = vmul.f32 %v1315, 0.1
    %v1382 = vmul.f32 %v1317, 0.1
    %v1383 = vmul.f32 %v1319, 0.1
    %v1384 = vmul.f32 %v1321, 0.1
    %v1385 = vmul.f32 %v1325, 0.1
    %v1386 = vmul.f32 %v1327, 0.1
    %v1387 = vmul.f32 %v1329, 0.1
    %v1388 = vmul.f32 %v1331, 0.1
    %v1389 = vmul.f32 %v1335, 0.1
    %v1390 = vmul.f32 %v1337, 0.1
    %v1391 = vmul.f32 %v1339, 0.1
    %v1392 = vmul.f32 %v1341, 0.1
    %v1393 = vmul.f32 %v1345, 0.1
    %v1394 = vmul.f32 %v1347, 0.1
    %v1395 = vmul.f32 %v1349, 0.1
    %v1396 = vmul.f32 %v1351, 0.1
    %v1397 = vmul.f32 %v1355, 0.1
    %v1398 = vmul.f32 %v1357, 0.1
    %v1399 = vmul.f32 %v1359, 0.1
    %v1400 = vmul.f32 %v1361, 0.1
    %v1401 = vmul.f32 %v1365, 0.1
    %v1402 = vmul.f32 %v1367, 0.1
    %v1403 = vmul.f32 %v1369, 0.1
    %v1404 = vmul.f32 %v1371, 0.1
    %v1405 = vmax.f32 %v1295, %v1373
    %v1406 = vmax.f32 %v1297, %v1374
    %v1407 = vmax.f32 %v1299, %v1375
    %v1408 = vmax.f32 %v1301, %v1376
    %v1409 = vmax.f32 %v1305, %v1377
    %v1410 = vmax.f32 %v1307, %v1378
    %v1411 = vmax.f32 %v1309, %v1379
    %v1412 = vmax.f32 %v1311, %v1380
    %v1413 = vmax.f32 %v1315, %v1381
    %v1414 = vmax.f32 %v1317, %v1382
    %v1415 = vmax.f32 %v1319, %v1383
    %v1416 = vmax.f32 %v1321, %v1384
    %v1417 = vmax.f32 %v1325, %v1385
    %v1418 = vmax.f32 %v1327, %v1386
    %v1419 = vmax.f32 %v1329, %v1387
    %v1420 = vmax.f32 %v1331, %v1388
    %v1421 = vmax.f32 %v1335, %v1389
    %v1422 = vmax.f32 %v1337, %v1390
    %v1423 = vmax.f32 %v1339, %v1391
    %v1424 = vmax.f32 %v1341, %v1392
    %v1425 = vmax.f32 %v1345, %v1393
    %v1426 = vmax.f32 %v1347, %v1394
    %v1427 = vmax.f32 %v1349, %v1395
    %v1428 = vmax.f32 %v1351, %v1396
    %v1429 = vmax.f32 %v1355, %v1397
    %v1430 = vmax.f32 %v1357, %v1398
    %v1431 = vmax.f32 %v1359, %v1399
    %v1432 = vmax.f32 %v1361, %v1400
    %v1433 = vmax.f32 %v1365, %v1401
    %v1434 = vmax.f32 %v1367, %v1402
    %v1435 = vmax.f32 %v1369, %v1403
    %v1436 = vmax.f32 %v1371, %v1404
    %s1437 = scalar_lea.vmem %s2, 192
    %v1438 = vld [vmem:[%s1437] sm:$0xf]
    %v1439 = vld [vmem:[%s1437 + $0x4] sm:$0xf]
    %v1440 = vld [vmem:[%s1437 + $0x8] sm:$0xf]
    %v1441 = vld [vmem:[%s1437 + $0xc] sm:$0xf]
    %v1442 = vld [vmem:[%s1437 + $0x10] sm:$0xf]
    %v1443 = vld [vmem:[%s1437 + $0x14] sm:$0xf]
    %v1444 = vld [vmem:[%s1437 + $0x18] sm:$0xf]
    %v1445 = vld [vmem:[%s1437 + $0x1c] sm:$0xf]
    %v1446 = vld [vmem:[%s1437 + $0x20] sm:$0xf]
    %v1447 = vld [vmem:[%s1437 + $0x24] sm:$0xf]
    %v1448 = vld [vmem:[%s1437 + $0x28] sm:$0xf]
    %v1449 = vld [vmem:[%s1437 + $0x2c] sm:$0xf]
    %v1450 = vld [vmem:[%s1437 + $0x30] sm:$0xf]
    %v1451 = vld [vmem:[%s1437 + $0x34] sm:$0xf]
    %v1452 = vld [vmem:[%s1437 + $0x38] sm:$0xf]
    %v1453 = vld [vmem:[%s1437 + $0x3c] sm:$0xf]
    %v1454 = vpack.c.bf16 %v1407, %v1405
    %v1455 = vpack.c.bf16 %v1408, %v1406
    %v1456 = vpack.c.bf16 %v1411, %v1409
    %v1457 = vpack.c.bf16 %v1412, %v1410
    %v1458 = vpack.c.bf16 %v1415, %v1413
    %v1459 = vpack.c.bf16 %v1416, %v1414
    %v1460 = vpack.c.bf16 %v1419, %v1417
    %v1461 = vpack.c.bf16 %v1420, %v1418
    %v1462 = vpack.c.bf16 %v1423, %v1421
    %v1463 = vpack.c.bf16 %v1424, %v1422
    %v1464 = vpack.c.bf16 %v1427, %v1425
    %v1465 = vpack.c.bf16 %v1428, %v1426
    %v1466 = vpack.c.bf16 %v1431, %v1429
    %v1467 = vpack.c.bf16 %v1432, %v1430
    %v1468 = vpack.c.bf16 %v1435, %v1433
    %v1469 = vpack.c.bf16 %v1436, %v1434
    %1470 = vset.pattern.permute.xlu0 4
    %1471 = vperm.xlu0 %1470, %v22
    %v1472 = vpop.permute.xlu0 %1471
    %1474 = vset.pattern.permute.xlu0 4
    %1475 = vperm.xlu0 %1474, %v23
    %v1476 = vpop.permute.xlu0 %1475
    %1478 = vset.pattern.permute.xlu0 4
    %1479 = vperm.xlu0 %1478, %v24
    %v1480 = vpop.permute.xlu0 %1479
    %1482 = vset.pattern.permute.xlu0 4
    %1483 = vperm.xlu0 %1482, %v25
    %v1484 = vpop.permute.xlu0 %1483
    %1486 = vset.pattern.permute.xlu0 4
    %1487 = vperm.xlu0 %1486, %v26
    %v1488 = vpop.permute.xlu0 %1487
    %1490 = vset.pattern.permute.xlu0 4
    %1491 = vperm.xlu0 %1490, %v27
    %v1492 = vpop.permute.xlu0 %1491
    %1494 = vset.pattern.permute.xlu0 4
    %1495 = vperm.xlu0 %1494, %v28
    %v1496 = vpop.permute.xlu0 %1495
    %1498 = vset.pattern.permute.xlu0 4
    %1499 = vperm.xlu0 %1498, %v29
    %v1500 = vpop.permute.xlu0 %1499
    %1502 = vset.pattern.permute.xlu0 4
    %1503 = vperm.xlu0 %1502, %v30
    %v1504 = vpop.permute.xlu0 %1503
    %1506 = vset.pattern.permute.xlu0 4
    %1507 = vperm.xlu0 %1506, %v31
    %v1508 = vpop.permute.xlu0 %1507
    %1510 = vset.pattern.permute.xlu0 4
    %1511 = vperm.xlu0 %1510, %v32
    %v1512 = vpop.permute.xlu0 %1511
    %1514 = vset.pattern.permute.xlu0 4
    %1515 = vperm.xlu0 %1514, %v33
    %v1516 = vpop.permute.xlu0 %1515
    %1518 = vset.pattern.permute.xlu0 4
    %1519 = vperm.xlu0 %1518, %v34
    %v1520 = vpop.permute.xlu0 %1519
    %1522 = vset.pattern.permute.xlu0 4
    %1523 = vperm.xlu0 %1522, %v35
    %v1524 = vpop.permute.xlu0 %1523
    %1526 = vset.pattern.permute.xlu0 4
    %1527 = vperm.xlu0 %1526, %v36
    %v1528 = vpop.permute.xlu0 %1527
    %1530 = vset.pattern.permute.xlu0 4
    %1531 = vperm.xlu0 %1530, %v37
    %v1532 = vpop.permute.xlu0 %1531
    %v1550 = vunpack.c.l.b16 %v1438
    %v1551 = vunpack.c.l.b16 %v1439
    %v1552 = vunpack.c.l.b16 %v1440
    %v1553 = vunpack.c.l.b16 %v1441
    %v1554 = vunpack.c.l.b16 %v1442
    %v1555 = vunpack.c.l.b16 %v1443
    %v1556 = vunpack.c.l.b16 %v1444
    %v1557 = vunpack.c.l.b16 %v1445
    %v1558 = vunpack.c.l.b16 %v1446
    %v1559 = vunpack.c.l.b16 %v1447
    %v1560 = vunpack.c.l.b16 %v1448
    %v1561 = vunpack.c.l.b16 %v1449
    %v1562 = vunpack.c.l.b16 %v1450
    %v1563 = vunpack.c.l.b16 %v1451
    %v1564 = vunpack.c.l.b16 %v1452
    %v1565 = vunpack.c.l.b16 %v1453
    %v1566 = vpack.c.b16 %v1551, %v1550
    %v1567 = vpack.c.b16 %v1553, %v1552
    %v1568 = vpack.c.b16 %v1555, %v1554
    %v1569 = vpack.c.b16 %v1557, %v1556
    %v1570 = vpack.c.b16 %v1559, %v1558
    %v1571 = vpack.c.b16 %v1561, %v1560
    %v1572 = vpack.c.b16 %v1563, %v1562
    %v1573 = vpack.c.b16 %v1565, %v1564
    %1582 = vmatprep.subr.bf16.mxu0 %v1469
    %1583 = vmatpush1.bf16.msra.mxu0 %v1468
    %1584 = vmatprep.subr.bf16.mxu0 %v1467
    %1585 = vmatpush1.bf16.msra.mxu0 %v1466
    %1586 = vmatprep.subr.bf16.mxu0 %v1465
    %1587 = vmatpush1.bf16.msra.mxu0 %v1464
    %1588 = vmatprep.subr.bf16.mxu0 %v1463
    %1589 = vmatpush1.bf16.msra.mxu0 %v1462
    %1590 = vmatprep.subr.bf16.mxu0 %v1461
    %1591 = vmatpush1.bf16.msra.mxu0 %v1460
    %1592 = vmatprep.subr.bf16.mxu0 %v1459
    %1593 = vmatpush1.bf16.msra.mxu0 %v1458
    %1594 = vmatprep.subr.bf16.mxu0 %v1457
    %1595 = vmatpush1.bf16.msra.mxu0 %v1456
    %1596 = vmatprep.subr.bf16.mxu0 %v1455
    %1597 = vmatpush1.bf16.msra.mxu0 %v1454
    %1598 = vmatprep.subr.bf16.mxu0 0
    %1599 = vmatpush2.bf16.msra.mxu0 0
    %1600 = vmatprep.subr.bf16.mxu0 0
    %1601 = vmatpush2.bf16.msra.mxu0 0
    %1602 = vmatprep.subr.bf16.mxu0 0
    %1603 = vmatpush2.bf16.msra.mxu0 0
    %1604 = vmatprep.subr.bf16.mxu0 0
    %1605 = vmatpush2.bf16.msra.mxu0 0
    %1606 = vmatprep.subr.bf16.mxu0 0
    %1607 = vmatpush2.bf16.msra.mxu0 0
    %1608 = vmatprep.subr.bf16.mxu0 0
    %1609 = vmatpush2.bf16.msra.mxu0 0
    %1610 = vmatprep.subr.bf16.mxu0 0
    %1611 = vmatpush2.bf16.msra.mxu0 0
    %1612 = vmatprep.subr.bf16.mxu0 0
    %1613 = vmatpush2.bf16.msra.mxu0 0
    %1614 = vmatprep.mubr.bf16.mxu0 0
    %1615 = vmatmul.mubr.bf16.gmra.mxu0 %v1566
    %v1616 = vpop.f32.mrf.mxu0
    %v1617 = vadd.f32 %v1472, %v1616
    %v1618 = vpop.f32.mrf.mxu0
    %v1619 = vadd.f32 %v1472, %v1618
    %v1620 = vpop.f32.mrf.mxu0
    %v1621 = vadd.f32 %v1476, %v1620
    %v1622 = vpop.f32.mrf.mxu0
    %v1623 = vadd.f32 %v1476, %v1622
    %1624 = vmatprep.mubr.bf16.mxu0 0
    %1625 = vmatmul.mubr.bf16.gmra.mxu0 %v1567
    %v1626 = vpop.f32.mrf.mxu0
    %v1627 = vadd.f32 %v1480, %v1626
    %v1628 = vpop.f32.mrf.mxu0
    %v1629 = vadd.f32 %v1480, %v1628
    %v1630 = vpop.f32.mrf.mxu0
    %v1631 = vadd.f32 %v1484, %v1630
    %v1632 = vpop.f32.mrf.mxu0
    %v1633 = vadd.f32 %v1484, %v1632
    %1634 = vmatprep.mubr.bf16.mxu0 0
    %1635 = vmatmul.mubr.bf16.gmra.mxu0 %v1568
    %v1636 = vpop.f32.mrf.mxu0
    %v1637 = vadd.f32 %v1488, %v1636
    %v1638 = vpop.f32.mrf.mxu0
    %v1639 = vadd.f32 %v1488, %v1638
    %v1640 = vpop.f32.mrf.mxu0
    %v1641 = vadd.f32 %v1492, %v1640
    %v1642 = vpop.f32.mrf.mxu0
    %v1643 = vadd.f32 %v1492, %v1642
    %1644 = vmatprep.mubr.bf16.mxu0 0
    %1645 = vmatmul.mubr.bf16.gmra.mxu0 %v1569
    %v1646 = vpop.f32.mrf.mxu0
    %v1647 = vadd.f32 %v1496, %v1646
    %v1648 = vpop.f32.mrf.mxu0
    %v1649 = vadd.f32 %v1496, %v1648
    %v1650 = vpop.f32.mrf.mxu0
    %v1651 = vadd.f32 %v1500, %v1650
    %v1652 = vpop.f32.mrf.mxu0
    %v1653 = vadd.f32 %v1500, %v1652
    %1654 = vmatprep.mubr.bf16.mxu0 0
    %1655 = vmatmul.mubr.bf16.gmra.mxu0 %v1570
    %v1656 = vpop.f32.mrf.mxu0
    %v1657 = vadd.f32 %v1504, %v1656
    %v1658 = vpop.f32.mrf.mxu0
    %v1659 = vadd.f32 %v1504, %v1658
    %v1660 = vpop.f32.mrf.mxu0
    %v1661 = vadd.f32 %v1508, %v1660
    %v1662 = vpop.f32.mrf.mxu0
    %v1663 = vadd.f32 %v1508, %v1662
    %1664 = vmatprep.mubr.bf16.mxu0 0
    %1665 = vmatmul.mubr.bf16.gmra.mxu0 %v1571
    %v1666 = vpop.f32.mrf.mxu0
    %v1667 = vadd.f32 %v1512, %v1666
    %v1668 = vpop.f32.mrf.mxu0
    %v1669 = vadd.f32 %v1512, %v1668
    %v1670 = vpop.f32.mrf.mxu0
    %v1671 = vadd.f32 %v1516, %v1670
    %v1672 = vpop.f32.mrf.mxu0
    %v1673 = vadd.f32 %v1516, %v1672
    %1674 = vmatprep.mubr.bf16.mxu0 0
    %1675 = vmatmul.mubr.bf16.gmra.mxu0 %v1572
    %v1676 = vpop.f32.mrf.mxu0
    %v1677 = vadd.f32 %v1520, %v1676
    %v1678 = vpop.f32.mrf.mxu0
    %v1679 = vadd.f32 %v1520, %v1678
    %v1680 = vpop.f32.mrf.mxu0
    %v1681 = vadd.f32 %v1524, %v1680
    %v1682 = vpop.f32.mrf.mxu0
    %v1683 = vadd.f32 %v1524, %v1682
    %1684 = vmatprep.mubr.bf16.mxu0 0
    %1685 = vmatmul.mubr.bf16.gmra.mxu0 %v1573
    %v1686 = vpop.f32.mrf.mxu0
    %v1687 = vadd.f32 %v1528, %v1686
    %v1688 = vpop.f32.mrf.mxu0
    %v1689 = vadd.f32 %v1528, %v1688
    %v1690 = vpop.f32.mrf.mxu0
    %v1691 = vadd.f32 %v1532, %v1690
    %v1692 = vpop.f32.mrf.mxu0
    %v1693 = vadd.f32 %v1532, %v1692
    %1694 = vdwg.mxu0
    %v1695 = vmul.f32 %v1617, 0.1
    %v1696 = vmul.f32 %v1619, 0.1
    %v1697 = vmul.f32 %v1621, 0.1
    %v1698 = vmul.f32 %v1623, 0.1
    %v1699 = vmul.f32 %v1627, 0.1
    %v1700 = vmul.f32 %v1629, 0.1
    %v1701 = vmul.f32 %v1631, 0.1
    %v1702 = vmul.f32 %v1633, 0.1
    %v1703 = vmul.f32 %v1637, 0.1
    %v1704 = vmul.f32 %v1639, 0.1
    %v1705 = vmul.f32 %v1641, 0.1
    %v1706 = vmul.f32 %v1643, 0.1
    %v1707 = vmul.f32 %v1647, 0.1
    %v1708 = vmul.f32 %v1649, 0.1
    %v1709 = vmul.f32 %v1651, 0.1
    %v1710 = vmul.f32 %v1653, 0.1
    %v1711 = vmul.f32 %v1657, 0.1
    %v1712 = vmul.f32 %v1659, 0.1
    %v1713 = vmul.f32 %v1661, 0.1
    %v1714 = vmul.f32 %v1663, 0.1
    %v1715 = vmul.f32 %v1667, 0.1
    %v1716 = vmul.f32 %v1669, 0.1
    %v1717 = vmul.f32 %v1671, 0.1
    %v1718 = vmul.f32 %v1673, 0.1
    %v1719 = vmul.f32 %v1677, 0.1
    %v1720 = vmul.f32 %v1679, 0.1
    %v1721 = vmul.f32 %v1681, 0.1
    %v1722 = vmul.f32 %v1683, 0.1
    %v1723 = vmul.f32 %v1687, 0.1
    %v1724 = vmul.f32 %v1689, 0.1
    %v1725 = vmul.f32 %v1691, 0.1
    %v1726 = vmul.f32 %v1693, 0.1
    %v1727 = vmax.f32 %v1617, %v1695
    %v1728 = vmax.f32 %v1619, %v1696
    %v1729 = vmax.f32 %v1621, %v1697
    %v1730 = vmax.f32 %v1623, %v1698
    %v1731 = vmax.f32 %v1627, %v1699
    %v1732 = vmax.f32 %v1629, %v1700
    %v1733 = vmax.f32 %v1631, %v1701
    %v1734 = vmax.f32 %v1633, %v1702
    %v1735 = vmax.f32 %v1637, %v1703
    %v1736 = vmax.f32 %v1639, %v1704
    %v1737 = vmax.f32 %v1641, %v1705
    %v1738 = vmax.f32 %v1643, %v1706
    %v1739 = vmax.f32 %v1647, %v1707
    %v1740 = vmax.f32 %v1649, %v1708
    %v1741 = vmax.f32 %v1651, %v1709
    %v1742 = vmax.f32 %v1653, %v1710
    %v1743 = vmax.f32 %v1657, %v1711
    %v1744 = vmax.f32 %v1659, %v1712
    %v1745 = vmax.f32 %v1661, %v1713
    %v1746 = vmax.f32 %v1663, %v1714
    %v1747 = vmax.f32 %v1667, %v1715
    %v1748 = vmax.f32 %v1669, %v1716
    %v1749 = vmax.f32 %v1671, %v1717
    %v1750 = vmax.f32 %v1673, %v1718
    %v1751 = vmax.f32 %v1677, %v1719
    %v1752 = vmax.f32 %v1679, %v1720
    %v1753 = vmax.f32 %v1681, %v1721
    %v1754 = vmax.f32 %v1683, %v1722
    %v1755 = vmax.f32 %v1687, %v1723
    %v1756 = vmax.f32 %v1689, %v1724
    %v1757 = vmax.f32 %v1691, %v1725
    %v1758 = vmax.f32 %v1693, %v1726
    %v1759 = vld [vmem:[%s3] sm:$0x1]
    %v1760 = vpack.c.bf16 %v1729, %v1727
    %v1761 = vpack.c.bf16 %v1730, %v1728
    %v1762 = vpack.c.bf16 %v1733, %v1731
    %v1763 = vpack.c.bf16 %v1734, %v1732
    %v1764 = vpack.c.bf16 %v1737, %v1735
    %v1765 = vpack.c.bf16 %v1738, %v1736
    %v1766 = vpack.c.bf16 %v1741, %v1739
    %v1767 = vpack.c.bf16 %v1742, %v1740
    %v1768 = vpack.c.bf16 %v1745, %v1743
    %v1769 = vpack.c.bf16 %v1746, %v1744
    %v1770 = vpack.c.bf16 %v1749, %v1747
    %v1771 = vpack.c.bf16 %v1750, %v1748
    %v1772 = vpack.c.bf16 %v1753, %v1751
    %v1773 = vpack.c.bf16 %v1754, %v1752
    %v1774 = vpack.c.bf16 %v1757, %v1755
    %v1775 = vpack.c.bf16 %v1758, %v1756
    %v1776 = vld [vmem:[%s4] sm:$0x1]
    %1778 = vset.pattern.permute.xlu0 5
    %1779 = vperm.xlu0 %1778, %v1776
    %v1780 = vpop.permute.xlu0 %1779
    %1782 = vmatprep.subr.bf16.mxu0 %v1775
    %1783 = vmatpush1.bf16.msra.mxu0 %v1774
    %1784 = vmatprep.subr.bf16.mxu0 %v1773
    %1785 = vmatpush1.bf16.msra.mxu0 %v1772
    %1786 = vmatprep.subr.bf16.mxu0 %v1771
    %1787 = vmatpush1.bf16.msra.mxu0 %v1770
    %1788 = vmatprep.subr.bf16.mxu0 %v1769
    %1789 = vmatpush1.bf16.msra.mxu0 %v1768
    %1790 = vmatprep.subr.bf16.mxu0 %v1767
    %1791 = vmatpush1.bf16.msra.mxu0 %v1766
    %1792 = vmatprep.subr.bf16.mxu0 %v1765
    %1793 = vmatpush1.bf16.msra.mxu0 %v1764
    %1794 = vmatprep.subr.bf16.mxu0 %v1763
    %1795 = vmatpush1.bf16.msra.mxu0 %v1762
    %1796 = vmatprep.subr.bf16.mxu0 %v1761
    %1797 = vmatpush1.bf16.msra.mxu0 %v1760
    %1798 = vmatprep.subr.bf16.mxu0 0
    %1799 = vmatpush2.bf16.msra.mxu0 0
    %1800 = vmatprep.subr.bf16.mxu0 0
    %1801 = vmatpush2.bf16.msra.mxu0 0
    %1802 = vmatprep.subr.bf16.mxu0 0
    %1803 = vmatpush2.bf16.msra.mxu0 0
    %1804 = vmatprep.subr.bf16.mxu0 0
    %1805 = vmatpush2.bf16.msra.mxu0 0
    %1806 = vmatprep.subr.bf16.mxu0 0
    %1807 = vmatpush2.bf16.msra.mxu0 0
    %1808 = vmatprep.subr.bf16.mxu0 0
    %1809 = vmatpush2.bf16.msra.mxu0 0
    %1810 = vmatprep.subr.bf16.mxu0 0
    %1811 = vmatpush2.bf16.msra.mxu0 0
    %1812 = vmatprep.subr.bf16.mxu0 0
    %1813 = vmatpush2.bf16.msra.mxu0 0
    %1814 = vmatprep.mubr.bf16.mxu0 0
    %1815 = vmatmul.mubr.bf16.gmra.mxu0 %v1759
    %v1816 = vpop.f32.mrf.mxu0
    %v1817 = vadd.f32 %v1780, %v1816
    %v1818 = vpop.f32.mrf.mxu0
    %v1819 = vadd.f32 %v1780, %v1818
    %v1820 = vpop.f32.mrf.mxu0
    %v1821 = vpop.f32.mrf.mxu0
    %1822 = vdwg.mxu0
    %v1825 = vcombine.low %v1817, %v1819
    %v1827 = vunpack.c.l.s4 1966171168
    %v1828 = vunpack.c.0.s8 %v1827
    %v1829 = vlaneseq
    %v1830 = vshrl.u32 %v1829, 7
    %v1831 = vsub.s32 %v1828, %v1830
    %v1832 = vrot.slane %v1825, %v1831
    %v1834 = vunpack.c.l.s4 1966171168
    %v1835 = vunpack.c.0.s8 %v1834
    %v1836 = vlaneseq
    %v1837 = vshrl.u32 %v1836, 7
    %v1838 = vsub.s32 %v1835, %v1837
    %v1839 = vrot.slane %v1832, %v1838
    %v1841 = vlaneseq
    %vm1842 = vcmp.ge.s32.totalorder %v1841, 0
    %vm1843 = vcmp.lt.s32.totalorder %v1841, 256
    %vm1844 = vmand %vm1842, %vm1843
    %1845 = vst.msk [vmem:[#allocation2] sm:$0x3] %vm1844, %v1839
    // Predicated region
    $region22: #{_forward_impl.1} parent=1 // pred_check
      _
    $region23: #{_forward_impl.1} parent=1 // pred_check_branch
      %1847 = sbr.rel (0) target = $region25
    $region24: #{_forward_impl.1} parent=1 // pred_region
      %s1849 = ssub.s32 32, 32
      %1850 = vsyncadd [#allocation3], %s1849
      %s1852 = sshll.u32 [#allocation2], 4
      %s1853 = int_to_ptr.vmem [resolvable:$true] %s1852
      %1855 = dma.vmem_to_hbm [thread:$0]  %s1853, 32, %s5, [#allocation3]
    $region25: #{_forward_impl.1} parent=1 // pred_fallthru
      _
    // Predicated region
    $region26: #{_forward_impl.1} parent=1 // pred_check
      _
    $region27: #{_forward_impl.1} parent=1 // pred_check_branch
      %1857 = sbr.rel (0) target = $region29
    $region28: #{_forward_impl.1} parent=1 // pred_region
      %1858 = dma.done [#allocation3], 32
    $region29: #{_forward_impl.1} parent=1 // pred_fallthru
      _
    %1859 = vsyncpa [#allocation3], 1

</llo_original>
